<compile_context>
chip_gen: v5e
topology: v5e:2x2
jax: 0.10.0
libtpu: 0.0.40
codegen_flags: <defaults>
</compile_context>

<pallas_src>
import functools

import jax
import jax.numpy as jnp
import numpy as np
from jax.experimental import pallas as pl
from jax.experimental.pallas import tpu as pltpu


# ----------------------------- in-kernel helpers -----------------------------

def _layernorm(x, g, b, eps):
    mu = jnp.mean(x, axis=-1, keepdims=True)
    var = jnp.mean((x - mu) ** 2, axis=-1, keepdims=True)
    return (x - mu) * jax.lax.rsqrt(var + eps) * g + b


def _gelu_tanh(x):
    # torch.nn.functional.gelu(..., approximate='tanh')
    c = jnp.asarray(np.sqrt(2.0 / np.pi), x.dtype)
    return 0.5 * x * (1.0 + jnp.tanh(c * (x + 0.044715 * x * x * x)))


# --------------------------------- kernel ------------------------------------

def encoder_layer_kernel(x_ref,
                         ln1_g_ref, ln1_b_ref,
                         w_qkv_ref, b_qkv_ref,
                         wo_ref, bo_ref,
                         ln2_g_ref, ln2_b_ref,
                         w1_ref, b1_ref, w2_ref, b2_ref,
                         o_ref,
                         *, num_heads, head_dim, eps, mlp_chunks):
    BT, S, D = x_ref.shape
    T = BT * S
    D_mlp = w1_ref.shape[1]

    x = x_ref[...].reshape(T, D)                       # (T, D) fp32

    # ---- LayerNorm 1 + fused QKV projection (scale pre-folded into Q cols) ----
    h = _layernorm(x, ln1_g_ref[...], ln1_b_ref[...], eps)
    qkv = jnp.dot(h.astype(jnp.bfloat16), w_qkv_ref[...],
                  preferred_element_type=jnp.float32) + b_qkv_ref[...]
    q = qkv[:, 0 * D:1 * D].reshape(BT, S, D).astype(jnp.bfloat16)
    k = qkv[:, 1 * D:2 * D].reshape(BT, S, D).astype(jnp.bfloat16)
    v = qkv[:, 2 * D:3 * D].reshape(BT, S, D).astype(jnp.bfloat16)

    # ---- multi-head self-attention (per-head scores, single K=D out-proj) ----
    # Heads stay a short static loop (a two-batch-dim contraction would need a
    # second-minor relayout); per-head contexts are gathered lane-dense with
    # one concatenate, then projected with ONE full-depth (T,D)@(D,D) matmul.
    ctx_heads = []
    for hi in range(num_heads):
        lo = hi * head_dim
        qh = q[:, :, lo:lo + head_dim]
        kh = k[:, :, lo:lo + head_dim]
        vh = v[:, :, lo:lo + head_dim]
        s = jnp.einsum("bqd,bkd->bqk", qh, kh,
                       preferred_element_type=jnp.float32)
        s = s - jnp.max(s, axis=-1, keepdims=True)
        p = jnp.exp(s)
        # exact per-row normalizer (one fp32 reciprocal per row; closer parity
        # with the fp32 reference than the approximate EUP reciprocal)
        p = p * (1.0 / jnp.sum(p, axis=-1, keepdims=True))
        ctx_heads.append(jnp.einsum("bqk,bkd->bqd", p.astype(jnp.bfloat16), vh,
                                    preferred_element_type=jnp.float32))
    ctx = jnp.concatenate(ctx_heads, axis=-1).reshape(T, D)
    attn = jnp.dot(ctx.astype(jnp.bfloat16), wo_ref[...],
                   preferred_element_type=jnp.float32) + bo_ref[...]

    x1 = attn + x                                      # residual 1

    # ---- LayerNorm 2 + MLP (tanh GELU), optionally chunked over D_mlp -------
    h2 = _layernorm(x1, ln2_g_ref[...], ln2_b_ref[...], eps).astype(jnp.bfloat16)
    chunk = D_mlp // mlp_chunks
    mlp = None
    for ci in range(mlp_chunks):
        lo = ci * chunk
        m = jnp.dot(h2, w1_ref[:, lo:lo + chunk],
                    preferred_element_type=jnp.float32) + b1_ref[:, lo:lo + chunk]
        m = _gelu_tanh(m)
        part = jnp.dot(m.astype(jnp.bfloat16), w2_ref[lo:lo + chunk, :],
                       preferred_element_type=jnp.float32)
        mlp = part if mlp is None else mlp + part

    o_ref[...] = (mlp + b2_ref[...] + x1).reshape(BT, S, D).astype(o_ref.dtype)


# ----------------------- one-time parameter packing ---------------------------

def pack_layer_params(p, num_heads):
    """Fuse QKV weights, fold the 1/sqrt(head_dim) scale into the Q columns and
    cast matmul weights to bf16.  Call ONCE at parameter-load time (outside the
    jitted forward) so the concat/cast XLA ops never sit in the hot path."""
    D = p["wq"].shape[0]
    scale = (D // num_heads) ** (-0.5)
    w_qkv = jnp.concatenate([p["wq"] * scale, p["wk"], p["wv"]],
                            axis=1).astype(jnp.bfloat16)
    b_qkv = jnp.concatenate([p["bq"] * scale, p["bk"], p["bv"]],
                            axis=1).astype(jnp.float32)
    return (p["ln1_g"], p["ln1_b"], w_qkv, b_qkv,
            p["wo"].astype(jnp.bfloat16), p["bo"],
            p["ln2_g"], p["ln2_b"],
            p["w1"].astype(jnp.bfloat16), p["b1"],
            p["w2"].astype(jnp.bfloat16), p["b2"])


def prepare_encoder_params(layer_params, *, num_heads):
    return [pack_layer_params(p, num_heads) for p in layer_params]


# ------------------------------ tiling helpers --------------------------------

def _default_batch_tile(B, S, target_rows=512):
    """Largest divisor of B s.t. tile*S <= ~512 token rows, preferring >=2 grid
    steps so the pipeline double-buffers and v7x can megacore-shard."""
    divisors = [d for d in range(1, B + 1) if B % d == 0]
    fitting = [d for d in divisors if d * S <= target_rows] or [1]
    multi = [d for d in fitting if B // d >= 2]
    return max(multi) if multi else max(fitting)


def _default_mlp_chunks(d_mlp, max_chunk=2048):
    """Smallest divisor count keeping each w1/GELU chunk <= max_chunk wide
    (e.g. D_mlp=3072 -> 2 chunks of 1536; toy D_mlp=128 -> 1 chunk)."""
    for n in range(1, d_mlp + 1):
        if d_mlp % n == 0 and d_mlp // n <= max_chunk:
            return n
    return 1


@functools.lru_cache(maxsize=None)
def _vmem_limit_bytes():
    """Generation-aware scoped-VMEM limit: ~3/4 of physical VMEM, capped at
    100 MiB (=> ~96 MiB on v5e/v6e's 128 MiB, ~48 MiB on v7x's 64 MiB/TC)."""
    cap = 128 * 1024 * 1024
    try:
        info = pltpu.get_tpu_info()
        cap = int(getattr(info, "vmem_capacity_bytes", cap) or cap)
    except Exception:
        pass
    return int(max(32 * 1024 * 1024, min(3 * cap // 4, 100 * 1024 * 1024)))


@functools.lru_cache(maxsize=None)
def _single_buffered_weights_supported():
    """Feature-detect BlockSpec(pipeline_mode=pl.Buffered(1)) with a tiny probe
    kernel; if unsupported on this jax/Mosaic build we fall back to the default
    (double-buffered) weight specs instead of failing to compile."""
    try:
        def probe(x_ref, w_ref, o_ref):
            o_ref[...] = x_ref[...] + w_ref[...]

        f = pl.pallas_call(
            probe,
            out_shape=jax.ShapeDtypeStruct((16, 128), jnp.float32),
            grid_spec=pltpu.PrefetchScalarGridSpec(
                num_scalar_prefetch=0,
                grid=(2,),
                in_specs=[pl.BlockSpec((8, 128), lambda i: (i, 0)),
                          pl.BlockSpec((8, 128), lambda i: (0, 0),
                                       pipeline_mode=pl.Buffered(1))],
                out_specs=pl.BlockSpec((8, 128), lambda i: (i, 0)),
            ),
        )
        jax.block_until_ready(f(jnp.zeros((16, 128), jnp.float32),
                                jnp.ones((8, 128), jnp.float32)))
        return True
    except Exception:
        return False


def _weight_spec(arr, single_buffer):
    zeros = (0,) * arr.ndim
    index_map = lambda i, _z=zeros: _z          # constant block -> stays resident
    if single_buffer:
        return pl.BlockSpec(arr.shape, index_map, pipeline_mode=pl.Buffered(1))
    return pl.BlockSpec(arr.shape, index_map)


def _cost_estimate(B, S, D, d_mlp, num_heads):
    T = B * S
    flops = (2 * T * D * 3 * D          # fused QKV
             + 4 * B * S * S * D        # scores + context
             + 2 * T * D * D            # output projection
             + 4 * T * D * d_mlp)       # MLP (two matmuls)
    transcendentals = B * num_heads * S * S + T * d_mlp + 2 * T
    bytes_accessed = (2 * T * D * 4                                   # x in/out
                      + 2 * (3 * D * D + D * D + 2 * D * d_mlp)       # bf16 weights
                      + 4 * (8 * D + d_mlp))                          # biases/LN
    return pl.CostEstimate(flops=flops, transcendentals=transcendentals,
                           bytes_accessed=bytes_accessed)


# -------------------------------- wrapper -------------------------------------

def encoder_layer_pallas(x, packed, *, num_heads, eps,
                         batch_tile=None, mlp_chunks=None):
    B, S, D = x.shape
    head_dim = D // num_heads
    d_mlp = packed[8].shape[1]          # w1 is (D, D_mlp)
    bt = _default_batch_tile(B, S) if batch_tile is None else batch_tile
    assert B % bt == 0, "batch_tile must divide the batch"
    if mlp_chunks is None:
        mlp_chunks = _default_mlp_chunks(d_mlp)
    # TODO(synk): if S (number of unmasked patches, e.g. 49) is not a multiple
    # of 8 at production shapes, pad S in the wrapper (key-mask the pad) to
    # avoid partially masked sublanes in the (bt, S, S) score tensor.

    single_buffer = _single_buffered_weights_supported()
    in_specs = [pl.BlockSpec((bt, S, D), lambda i: (i, 0, 0))]
    in_specs += [_weight_spec(w, single_buffer) for w in packed]

    kernel = functools.partial(encoder_layer_kernel, num_heads=num_heads,
                               head_dim=head_dim, eps=eps, mlp_chunks=mlp_chunks)
    return pl.pallas_call(
        kernel,
        out_shape=jax.ShapeDtypeStruct((B, S, D), x.dtype),
        grid_spec=pltpu.PrefetchScalarGridSpec(
            num_scalar_prefetch=0,
            grid=(B // bt,),
            in_specs=in_specs,
            out_specs=pl.BlockSpec((bt, S, D), lambda i: (i, 0, 0)),
        ),
        compiler_params=pltpu.CompilerParams(
            dimension_semantics=("parallel",),
            vmem_limit_bytes=_vmem_limit_bytes(),
        ),
        cost_estimate=_cost_estimate(B, S, D, d_mlp, num_heads),
    )(x, *packed)


def mae_encoder_pallas(x, packed_layers, *, num_heads, eps, batch_tile=None):
    # MAE_Encoder.forward applies EVERY layer to the ORIGINAL input (the loop
    # variable is never reassigned) and returns only the LAST layer's output,
    # so layers 0..N-2 are dead compute: launching only the last layer is
    # bit-identical and saves N-1 pallas_call launches.
    return encoder_layer_pallas(x, packed_layers[-1], num_heads=num_heads,
                                eps=eps, batch_tile=batch_tile)


# --------------------------- pure-JAX reference -------------------------------

def encoder_layer_ref(x, p, *, num_heads, eps):
    B, S, D = x.shape
    hd = D // num_heads
    scale = hd ** (-0.5)

    def ln(v, g, b):
        mu = jnp.mean(v, axis=-1, keepdims=True)
        var = jnp.mean((v - mu) ** 2, axis=-1, keepdims=True)
        return (v - mu) * jax.lax.rsqrt(var + eps) * g + b

    h = ln(x, p["ln1_g"][0], p["ln1_b"][0])
    q = h @ p["wq"] + p["bq"][0]
    k = h @ p["wk"] + p["bk"][0]
    v = h @ p["wv"] + p["bv"][0]
    q = q.reshape(B, S, num_heads, hd).transpose(0, 2, 1, 3)
    k = k.reshape(B, S, num_heads, hd).transpose(0, 2, 1, 3)
    v = v.reshape(B, S, num_heads, hd).transpose(0, 2, 1, 3)
    s = jnp.einsum("bhqd,bhkd->bhqk", q, k) * scale
    s = s - jnp.max(s, axis=-1, keepdims=True)
    w = jnp.exp(s)
    w = w / jnp.sum(w, axis=-1, keepdims=True)
    a = jnp.einsum("bhqk,bhkd->bhqd", w, v)
    a = a.transpose(0, 2, 1, 3).reshape(B, S, D)
    a = a @ p["wo"] + p["bo"][0]
    x1 = a + x
    h2 = ln(x1, p["ln2_g"][0], p["ln2_b"][0])
    m = h2 @ p["w1"] + p["b1"][0]
    c = np.sqrt(2.0 / np.pi).astype(np.float32)
    m = 0.5 * m * (1.0 + jnp.tanh(c * (m + 0.044715 * m * m * m)))
    m = m @ p["w2"] + p["b2"][0]
    return m + x1


def mae_encoder_ref(x, layer_params, *, num_heads, eps):
    out = None
    for p in layer_params:              # faithful to the PyTorch loop quirk
        out = encoder_layer_ref(x, p, num_heads=num_heads, eps=eps)
    return out


# ------------------------------ param init ------------------------------------

def init_layer_params(key, D, D_mlp):
    ks = jax.random.split(key, 12)

    def lin(kw, kb, fan_in, fan_out):
        w = jax.random.normal(kw, (fan_in, fan_out), jnp.float32) / np.sqrt(fan_in)
        b = 0.01 * jax.random.normal(kb, (1, fan_out), jnp.float32)
        return w, b

    wq, bq = lin(ks[0], ks[1], D, D)
    wk, bk = lin(ks[2], ks[3], D, D)
    wv, bv = lin(ks[4], ks[5], D, D)
    wo, bo = lin(ks[6], ks[7], D, D)
    w1, b1 = lin(ks[8], ks[9], D, D_mlp)
    w2, b2 = lin(ks[10], ks[11], D_mlp, D)
    return dict(
        ln1_g=jnp.ones((1, D), jnp.float32), ln1_b=jnp.zeros((1, D), jnp.float32),
        wq=wq, bq=bq, wk=wk, bk=bk, wv=wv, bv=bv, wo=wo, bo=bo,
        ln2_g=jnp.ones((1, D), jnp.float32), ln2_b=jnp.zeros((1, D), jnp.float32),
        w1=w1, b1=b1, w2=w2, b2=b2,
    )


# --------------------------------- main ---------------------------------------

if __name__ == "__main__":
    # Small config: enc_embed_dim=32, num_enc_attention_heads=4,
    # enc_mlp_layer_dim=4*32=128, num_enc_hidden_layers=2, eps=1e-6.
    B, S, D = 2, 8, 32
    NUM_HEADS = 4
    D_MLP = 4 * D
    NUM_LAYERS = 2
    EPS = 1e-6

    root = jax.random.PRNGKey(0)
    kx, *layer_keys = jax.random.split(root, 1 + NUM_LAYERS)
    x = jax.random.normal(kx, (B, S, D), jnp.float32)
    layer_params = [init_layer_params(k, D, D_MLP) for k in layer_keys]

    # Weight packing (QKV concat, scale fold, bf16 casts) happens ONCE here,
    # outside the jitted forward path.
    packed_layers = prepare_encoder_params(layer_params, num_heads=NUM_HEADS)

    fwd = jax.jit(functools.partial(mae_encoder_pallas,
                                    num_heads=NUM_HEADS, eps=EPS))
    out = jax.block_until_ready(fwd(x, packed_layers))

    ref = mae_encoder_ref(x, layer_params, num_heads=NUM_HEADS, eps=EPS)
    # bf16 MXU operands vs the fp32 reference (softmax normalizer is exact now).
    np.testing.assert_allclose(np.asarray(out), np.asarray(ref),
                               rtol=2e-2, atol=2e-2)
    print("KERNEL_OK")
</pallas_src>

<mosaic_0001>
module attributes {stable_mosaic.version = 11 : i64} {
  func.func @encoder_layer_kernel(%arg0: i32, %arg1: memref<1x8x32xf32, #tpu.memory_space<vmem>>, %arg2: memref<1x32xf32, #tpu.memory_space<vmem>>, %arg3: memref<1x32xf32, #tpu.memory_space<vmem>>, %arg4: memref<32x96xbf16, #tpu.memory_space<vmem>>, %arg5: memref<1x96xf32, #tpu.memory_space<vmem>>, %arg6: memref<32x32xbf16, #tpu.memory_space<vmem>>, %arg7: memref<1x32xf32, #tpu.memory_space<vmem>>, %arg8: memref<1x32xf32, #tpu.memory_space<vmem>>, %arg9: memref<1x32xf32, #tpu.memory_space<vmem>>, %arg10: memref<32x128xbf16, #tpu.memory_space<vmem>>, %arg11: memref<1x128xf32, #tpu.memory_space<vmem>>, %arg12: memref<128x32xbf16, #tpu.memory_space<vmem>>, %arg13: memref<1x32xf32, #tpu.memory_space<vmem>>, %arg14: memref<1x8x32xf32, #tpu.memory_space<vmem>>) attributes {dimension_semantics = [#tpu.dimension_semantics<parallel>], iteration_bounds = array<i64: 2>, scalar_prefetch = 0 : i64, scratch_operands = 0 : i64, tpu.core_type = #tpu.core_type<tc>, window_params = [{transform_indices = @transform_0, window_bounds = array<i64: 1, 8, 32>}, {pipeline_mode = #tpu.pipeline_mode<synchronous>, transform_indices = @transform_1, window_bounds = array<i64: 1, 32>}, {pipeline_mode = #tpu.pipeline_mode<synchronous>, transform_indices = @transform_2, window_bounds = array<i64: 1, 32>}, {pipeline_mode = #tpu.pipeline_mode<synchronous>, transform_indices = @transform_3, window_bounds = array<i64: 32, 96>}, {pipeline_mode = #tpu.pipeline_mode<synchronous>, transform_indices = @transform_4, window_bounds = array<i64: 1, 96>}, {pipeline_mode = #tpu.pipeline_mode<synchronous>, transform_indices = @transform_5, window_bounds = array<i64: 32, 32>}, {pipeline_mode = #tpu.pipeline_mode<synchronous>, transform_indices = @transform_6, window_bounds = array<i64: 1, 32>}, {pipeline_mode = #tpu.pipeline_mode<synchronous>, transform_indices = @transform_7, window_bounds = array<i64: 1, 32>}, {pipeline_mode = #tpu.pipeline_mode<synchronous>, transform_indices = @transform_8, window_bounds = array<i64: 1, 32>}, {pipeline_mode = #tpu.pipeline_mode<synchronous>, transform_indices = @transform_9, window_bounds = array<i64: 32, 128>}, {pipeline_mode = #tpu.pipeline_mode<synchronous>, transform_indices = @transform_10, window_bounds = array<i64: 1, 128>}, {pipeline_mode = #tpu.pipeline_mode<synchronous>, transform_indices = @transform_11, window_bounds = array<i64: 128, 32>}, {pipeline_mode = #tpu.pipeline_mode<synchronous>, transform_indices = @transform_12, window_bounds = array<i64: 1, 32>}, {transform_indices = @transform_13, window_bounds = array<i64: 1, 8, 32>}]} {
    %c0 = arith.constant 0 : index
    %c0_0 = arith.constant 0 : index
    %c0_1 = arith.constant 0 : index
    %0 = vector.load %arg1[%c0, %c0_0, %c0_1] : memref<1x8x32xf32, #tpu.memory_space<vmem>>, vector<1x8x32xf32>
    %1 = vector.shape_cast %0 : vector<1x8x32xf32> to vector<8x32xf32>
    %c0_2 = arith.constant 0 : index
    %c0_3 = arith.constant 0 : index
    %2 = vector.load %arg2[%c0_2, %c0_3] : memref<1x32xf32, #tpu.memory_space<vmem>>, vector<1x32xf32>
    %c0_4 = arith.constant 0 : index
    %c0_5 = arith.constant 0 : index
    %3 = vector.load %arg3[%c0_4, %c0_5] : memref<1x32xf32, #tpu.memory_space<vmem>>, vector<1x32xf32>
    %cst = arith.constant dense<0.000000e+00> : vector<8xf32>
    %4 = vector.multi_reduction <add>, %1, %cst [1] : vector<8x32xf32> to vector<8xf32>
    %5 = vector.shape_cast %4 : vector<8xf32> to vector<8x1xf32>
    %cst_6 = arith.constant 3.200000e+01 : f32
    %6 = vector.broadcast %cst_6 : f32 to vector<8x1xf32>
    %7 = arith.divf %5, %6 : vector<8x1xf32>
    %8 = vector.broadcast %7 : vector<8x1xf32> to vector<8x32xf32>
    %9 = arith.subf %1, %8 : vector<8x32xf32>
    %10 = arith.mulf %9, %9 : vector<8x32xf32>
    %cst_7 = arith.constant dense<0.000000e+00> : vector<8xf32>
    %11 = vector.multi_reduction <add>, %10, %cst_7 [1] : vector<8x32xf32> to vector<8xf32>
    %12 = vector.shape_cast %11 : vector<8xf32> to vector<8x1xf32>
    %cst_8 = arith.constant 3.200000e+01 : f32
    %13 = vector.broadcast %cst_8 : f32 to vector<8x1xf32>
    %14 = arith.divf %12, %13 : vector<8x1xf32>
    %15 = vector.broadcast %7 : vector<8x1xf32> to vector<8x32xf32>
    %16 = arith.subf %1, %15 : vector<8x32xf32>
    %cst_9 = arith.constant 9.99999997E-7 : f32
    %17 = vector.broadcast %cst_9 : f32 to vector<8x1xf32>
    %18 = arith.addf %14, %17 : vector<8x1xf32>
    %19 = math.rsqrt %18 : vector<8x1xf32>
    %20 = vector.broadcast %19 : vector<8x1xf32> to vector<8x32xf32>
    %21 = arith.mulf %16, %20 : vector<8x32xf32>
    %22 = vector.broadcast %2 : vector<1x32xf32> to vector<8x32xf32>
    %23 = arith.mulf %21, %22 : vector<8x32xf32>
    %24 = vector.broadcast %3 : vector<1x32xf32> to vector<8x32xf32>
    %25 = arith.addf %23, %24 : vector<8x32xf32>
    %26 = arith.truncf %25 : vector<8x32xf32> to vector<8x32xbf16>
    %c0_10 = arith.constant 0 : index
    %c0_11 = arith.constant 0 : index
    %27 = vector.load %arg4[%c0_10, %c0_11] : memref<32x96xbf16, #tpu.memory_space<vmem>>, vector<32x96xbf16>
    %cst_12 = arith.constant dense<0.000000e+00> : vector<8x96xf32>
    %28 = tpu.matmul %26, %27, %cst_12 {dimension_numbers = #tpu.dot_dimension_numbers<[1], [0], [0], [1], [0, 0, 1, 1], [], []>} : vector<8x32xbf16>, vector<32x96xbf16>, vector<8x96xf32> -> vector<8x96xf32>
    %c0_13 = arith.constant 0 : index
    %c0_14 = arith.constant 0 : index
    %29 = vector.load %arg5[%c0_13, %c0_14] : memref<1x96xf32, #tpu.memory_space<vmem>>, vector<1x96xf32>
    %30 = vector.broadcast %29 : vector<1x96xf32> to vector<8x96xf32>
    %31 = arith.addf %28, %30 : vector<8x96xf32>
    %32 = vector.extract_strided_slice %31 {offsets = [0, 0], sizes = [8, 32], strides = [1, 1]} : vector<8x96xf32> to vector<8x32xf32>
    %33 = vector.shape_cast %32 : vector<8x32xf32> to vector<1x8x32xf32>
    %34 = arith.truncf %33 : vector<1x8x32xf32> to vector<1x8x32xbf16>
    %35 = vector.extract_strided_slice %31 {offsets = [0, 32], sizes = [8, 32], strides = [1, 1]} : vector<8x96xf32> to vector<8x32xf32>
    %36 = vector.shape_cast %35 : vector<8x32xf32> to vector<1x8x32xf32>
    %37 = arith.truncf %36 : vector<1x8x32xf32> to vector<1x8x32xbf16>
    %38 = vector.extract_strided_slice %31 {offsets = [0, 64], sizes = [8, 32], strides = [1, 1]} : vector<8x96xf32> to vector<8x32xf32>
    %39 = vector.shape_cast %38 : vector<8x32xf32> to vector<1x8x32xf32>
    %40 = arith.truncf %39 : vector<1x8x32xf32> to vector<1x8x32xbf16>
    %41 = vector.extract_strided_slice %34 {offsets = [0, 0, 0], sizes = [1, 8, 8], strides = [1, 1, 1]} : vector<1x8x32xbf16> to vector<1x8x8xbf16>
    %42 = vector.extract_strided_slice %37 {offsets = [0, 0, 0], sizes = [1, 8, 8], strides = [1, 1, 1]} : vector<1x8x32xbf16> to vector<1x8x8xbf16>
    %43 = vector.extract_strided_slice %40 {offsets = [0, 0, 0], sizes = [1, 8, 8], strides = [1, 1, 1]} : vector<1x8x32xbf16> to vector<1x8x8xbf16>
    "tpu.trace_start"() <{level = 10 : i32, message = "bqd,bkd->bqk"}> : () -> ()
    %cst_15 = arith.constant dense<0.000000e+00> : vector<1x8x8xf32>
    %44 = tpu.matmul %41, %42, %cst_15 {dimension_numbers = #tpu.dot_dimension_numbers<[2], [2], [1], [1], [0, 0, 0, 1, 1, 1], [0], [0]>} : vector<1x8x8xbf16>, vector<1x8x8xbf16>, vector<1x8x8xf32> -> vector<1x8x8xf32>
    "tpu.trace_stop"() : () -> ()
    %cst_16 = arith.constant dense<0xFF800000> : vector<1x8xf32>
    %45 = vector.multi_reduction <maximumf>, %44, %cst_16 [2] : vector<1x8x8xf32> to vector<1x8xf32>
    %46 = vector.shape_cast %45 : vector<1x8xf32> to vector<1x8x1xf32>
    %47 = vector.broadcast %46 : vector<1x8x1xf32> to vector<1x8x8xf32>
    %48 = arith.subf %44, %47 : vector<1x8x8xf32>
    %49 = math.exp %48 : vector<1x8x8xf32>
    %cst_17 = arith.constant dense<0.000000e+00> : vector<1x8xf32>
    %50 = vector.multi_reduction <add>, %49, %cst_17 [2] : vector<1x8x8xf32> to vector<1x8xf32>
    %51 = vector.shape_cast %50 : vector<1x8xf32> to vector<1x8x1xf32>
    %cst_18 = arith.constant 1.000000e+00 : f32
    %52 = vector.broadcast %cst_18 : f32 to vector<1x8x1xf32>
    %53 = arith.divf %52, %51 : vector<1x8x1xf32>
    %54 = vector.broadcast %53 : vector<1x8x1xf32> to vector<1x8x8xf32>
    %55 = arith.mulf %49, %54 : vector<1x8x8xf32>
    %56 = arith.truncf %55 : vector<1x8x8xf32> to vector<1x8x8xbf16>
    "tpu.trace_start"() <{level = 10 : i32, message = "bqk,bkd->bqd"}> : () -> ()
    %cst_19 = arith.constant dense<0.000000e+00> : vector<1x8x8xf32>
    %57 = tpu.matmul %56, %43, %cst_19 {dimension_numbers = #tpu.dot_dimension_numbers<[2], [1], [1], [2], [0, 0, 0, 1, 1, 2], [0], [0]>} : vector<1x8x8xbf16>, vector<1x8x8xbf16>, vector<1x8x8xf32> -> vector<1x8x8xf32>
    "tpu.trace_stop"() : () -> ()
    %58 = vector.extract_strided_slice %34 {offsets = [0, 0, 8], sizes = [1, 8, 8], strides = [1, 1, 1]} : vector<1x8x32xbf16> to vector<1x8x8xbf16>
    %59 = vector.extract_strided_slice %37 {offsets = [0, 0, 8], sizes = [1, 8, 8], strides = [1, 1, 1]} : vector<1x8x32xbf16> to vector<1x8x8xbf16>
    %60 = vector.extract_strided_slice %40 {offsets = [0, 0, 8], sizes = [1, 8, 8], strides = [1, 1, 1]} : vector<1x8x32xbf16> to vector<1x8x8xbf16>
    "tpu.trace_start"() <{level = 10 : i32, message = "bqd,bkd->bqk"}> : () -> ()
    %cst_20 = arith.constant dense<0.000000e+00> : vector<1x8x8xf32>
    %61 = tpu.matmul %58, %59, %cst_20 {dimension_numbers = #tpu.dot_dimension_numbers<[2], [2], [1], [1], [0, 0, 0, 1, 1, 1], [0], [0]>} : vector<1x8x8xbf16>, vector<1x8x8xbf16>, vector<1x8x8xf32> -> vector<1x8x8xf32>
    "tpu.trace_stop"() : () -> ()
    %cst_21 = arith.constant dense<0xFF800000> : vector<1x8xf32>
    %62 = vector.multi_reduction <maximumf>, %61, %cst_21 [2] : vector<1x8x8xf32> to vector<1x8xf32>
    %63 = vector.shape_cast %62 : vector<1x8xf32> to vector<1x8x1xf32>
    %64 = vector.broadcast %63 : vector<1x8x1xf32> to vector<1x8x8xf32>
    %65 = arith.subf %61, %64 : vector<1x8x8xf32>
    %66 = math.exp %65 : vector<1x8x8xf32>
    %cst_22 = arith.constant dense<0.000000e+00> : vector<1x8xf32>
    %67 = vector.multi_reduction <add>, %66, %cst_22 [2] : vector<1x8x8xf32> to vector<1x8xf32>
    %68 = vector.shape_cast %67 : vector<1x8xf32> to vector<1x8x1xf32>
    %cst_23 = arith.constant 1.000000e+00 : f32
    %69 = vector.broadcast %cst_23 : f32 to vector<1x8x1xf32>
    %70 = arith.divf %69, %68 : vector<1x8x1xf32>
    %71 = vector.broadcast %70 : vector<1x8x1xf32> to vector<1x8x8xf32>
    %72 = arith.mulf %66, %71 : vector<1x8x8xf32>
    %73 = arith.truncf %72 : vector<1x8x8xf32> to vector<1x8x8xbf16>
    "tpu.trace_start"() <{level = 10 : i32, message = "bqk,bkd->bqd"}> : () -> ()
    %cst_24 = arith.constant dense<0.000000e+00> : vector<1x8x8xf32>
    %74 = tpu.matmul %73, %60, %cst_24 {dimension_numbers = #tpu.dot_dimension_numbers<[2], [1], [1], [2], [0, 0, 0, 1, 1, 2], [0], [0]>} : vector<1x8x8xbf16>, vector<1x8x8xbf16>, vector<1x8x8xf32> -> vector<1x8x8xf32>
    "tpu.trace_stop"() : () -> ()
    %75 = vector.extract_strided_slice %34 {offsets = [0, 0, 16], sizes = [1, 8, 8], strides = [1, 1, 1]} : vector<1x8x32xbf16> to vector<1x8x8xbf16>
    %76 = vector.extract_strided_slice %37 {offsets = [0, 0, 16], sizes = [1, 8, 8], strides = [1, 1, 1]} : vector<1x8x32xbf16> to vector<1x8x8xbf16>
    %77 = vector.extract_strided_slice %40 {offsets = [0, 0, 16], sizes = [1, 8, 8], strides = [1, 1, 1]} : vector<1x8x32xbf16> to vector<1x8x8xbf16>
    "tpu.trace_start"() <{level = 10 : i32, message = "bqd,bkd->bqk"}> : () -> ()
    %cst_25 = arith.constant dense<0.000000e+00> : vector<1x8x8xf32>
    %78 = tpu.matmul %75, %76, %cst_25 {dimension_numbers = #tpu.dot_dimension_numbers<[2], [2], [1], [1], [0, 0, 0, 1, 1, 1], [0], [0]>} : vector<1x8x8xbf16>, vector<1x8x8xbf16>, vector<1x8x8xf32> -> vector<1x8x8xf32>
    "tpu.trace_stop"() : () -> ()
    %cst_26 = arith.constant dense<0xFF800000> : vector<1x8xf32>
    %79 = vector.multi_reduction <maximumf>, %78, %cst_26 [2] : vector<1x8x8xf32> to vector<1x8xf32>
    %80 = vector.shape_cast %79 : vector<1x8xf32> to vector<1x8x1xf32>
    %81 = vector.broadcast %80 : vector<1x8x1xf32> to vector<1x8x8xf32>
    %82 = arith.subf %78, %81 : vector<1x8x8xf32>
    %83 = math.exp %82 : vector<1x8x8xf32>
    %cst_27 = arith.constant dense<0.000000e+00> : vector<1x8xf32>
    %84 = vector.multi_reduction <add>, %83, %cst_27 [2] : vector<1x8x8xf32> to vector<1x8xf32>
    %85 = vector.shape_cast %84 : vector<1x8xf32> to vector<1x8x1xf32>
    %cst_28 = arith.constant 1.000000e+00 : f32
    %86 = vector.broadcast %cst_28 : f32 to vector<1x8x1xf32>
    %87 = arith.divf %86, %85 : vector<1x8x1xf32>
    %88 = vector.broadcast %87 : vector<1x8x1xf32> to vector<1x8x8xf32>
    %89 = arith.mulf %83, %88 : vector<1x8x8xf32>
    %90 = arith.truncf %89 : vector<1x8x8xf32> to vector<1x8x8xbf16>
    "tpu.trace_start"() <{level = 10 : i32, message = "bqk,bkd->bqd"}> : () -> ()
    %cst_29 = arith.constant dense<0.000000e+00> : vector<1x8x8xf32>
    %91 = tpu.matmul %90, %77, %cst_29 {dimension_numbers = #tpu.dot_dimension_numbers<[2], [1], [1], [2], [0, 0, 0, 1, 1, 2], [0], [0]>} : vector<1x8x8xbf16>, vector<1x8x8xbf16>, vector<1x8x8xf32> -> vector<1x8x8xf32>
    "tpu.trace_stop"() : () -> ()
    %92 = vector.extract_strided_slice %34 {offsets = [0, 0, 24], sizes = [1, 8, 8], strides = [1, 1, 1]} : vector<1x8x32xbf16> to vector<1x8x8xbf16>
    %93 = vector.extract_strided_slice %37 {offsets = [0, 0, 24], sizes = [1, 8, 8], strides = [1, 1, 1]} : vector<1x8x32xbf16> to vector<1x8x8xbf16>
    %94 = vector.extract_strided_slice %40 {offsets = [0, 0, 24], sizes = [1, 8, 8], strides = [1, 1, 1]} : vector<1x8x32xbf16> to vector<1x8x8xbf16>
    "tpu.trace_start"() <{level = 10 : i32, message = "bqd,bkd->bqk"}> : () -> ()
    %cst_30 = arith.constant dense<0.000000e+00> : vector<1x8x8xf32>
    %95 = tpu.matmul %92, %93, %cst_30 {dimension_numbers = #tpu.dot_dimension_numbers<[2], [2], [1], [1], [0, 0, 0, 1, 1, 1], [0], [0]>} : vector<1x8x8xbf16>, vector<1x8x8xbf16>, vector<1x8x8xf32> -> vector<1x8x8xf32>
    "tpu.trace_stop"() : () -> ()
    %cst_31 = arith.constant dense<0xFF800000> : vector<1x8xf32>
    %96 = vector.multi_reduction <maximumf>, %95, %cst_31 [2] : vector<1x8x8xf32> to vector<1x8xf32>
    %97 = vector.shape_cast %96 : vector<1x8xf32> to vector<1x8x1xf32>
    %98 = vector.broadcast %97 : vector<1x8x1xf32> to vector<1x8x8xf32>
    %99 = arith.subf %95, %98 : vector<1x8x8xf32>
    %100 = math.exp %99 : vector<1x8x8xf32>
    %cst_32 = arith.constant dense<0.000000e+00> : vector<1x8xf32>
    %101 = vector.multi_reduction <add>, %100, %cst_32 [2] : vector<1x8x8xf32> to vector<1x8xf32>
    %102 = vector.shape_cast %101 : vector<1x8xf32> to vector<1x8x1xf32>
    %cst_33 = arith.constant 1.000000e+00 : f32
    %103 = vector.broadcast %cst_33 : f32 to vector<1x8x1xf32>
    %104 = arith.divf %103, %102 : vector<1x8x1xf32>
    %105 = vector.broadcast %104 : vector<1x8x1xf32> to vector<1x8x8xf32>
    %106 = arith.mulf %100, %105 : vector<1x8x8xf32>
    %107 = arith.truncf %106 : vector<1x8x8xf32> to vector<1x8x8xbf16>
    "tpu.trace_start"() <{level = 10 : i32, message = "bqk,bkd->bqd"}> : () -> ()
    %cst_34 = arith.constant dense<0.000000e+00> : vector<1x8x8xf32>
    %108 = tpu.matmul %107, %94, %cst_34 {dimension_numbers = #tpu.dot_dimension_numbers<[2], [1], [1], [2], [0, 0, 0, 1, 1, 2], [0], [0]>} : vector<1x8x8xbf16>, vector<1x8x8xbf16>, vector<1x8x8xf32> -> vector<1x8x8xf32>
    "tpu.trace_stop"() : () -> ()
    %109 = tpu.concatenate %57, %74, %91, %108 in 2 : vector<1x8x8xf32>, vector<1x8x8xf32>, vector<1x8x8xf32>, vector<1x8x8xf32> -> vector<1x8x32xf32>
    %110 = vector.shape_cast %109 : vector<1x8x32xf32> to vector<8x32xf32>
    %111 = arith.truncf %110 : vector<8x32xf32> to vector<8x32xbf16>
    %c0_35 = arith.constant 0 : index
    %c0_36 = arith.constant 0 : index
    %112 = vector.load %arg6[%c0_35, %c0_36] : memref<32x32xbf16, #tpu.memory_space<vmem>>, vector<32x32xbf16>
    %cst_37 = arith.constant dense<0.000000e+00> : vector<8x32xf32>
    %113 = tpu.matmul %111, %112, %cst_37 {dimension_numbers = #tpu.dot_dimension_numbers<[1], [0], [0], [1], [0, 0, 1, 1], [], []>} : vector<8x32xbf16>, vector<32x32xbf16>, vector<8x32xf32> -> vector<8x32xf32>
    %c0_38 = arith.constant 0 : index
    %c0_39 = arith.constant 0 : index
    %114 = vector.load %arg7[%c0_38, %c0_39] : memref<1x32xf32, #tpu.memory_space<vmem>>, vector<1x32xf32>
    %115 = vector.broadcast %114 : vector<1x32xf32> to vector<8x32xf32>
    %116 = arith.addf %113, %115 : vector<8x32xf32>
    %117 = arith.addf %116, %1 : vector<8x32xf32>
    %c0_40 = arith.constant 0 : index
    %c0_41 = arith.constant 0 : index
    %118 = vector.load %arg8[%c0_40, %c0_41] : memref<1x32xf32, #tpu.memory_space<vmem>>, vector<1x32xf32>
    %c0_42 = arith.constant 0 : index
    %c0_43 = arith.constant 0 : index
    %119 = vector.load %arg9[%c0_42, %c0_43] : memref<1x32xf32, #tpu.memory_space<vmem>>, vector<1x32xf32>
    %cst_44 = arith.constant dense<0.000000e+00> : vector<8xf32>
    %120 = vector.multi_reduction <add>, %117, %cst_44 [1] : vector<8x32xf32> to vector<8xf32>
    %121 = vector.shape_cast %120 : vector<8xf32> to vector<8x1xf32>
    %cst_45 = arith.constant 3.200000e+01 : f32
    %122 = vector.broadcast %cst_45 : f32 to vector<8x1xf32>
    %123 = arith.divf %121, %122 : vector<8x1xf32>
    %124 = vector.broadcast %123 : vector<8x1xf32> to vector<8x32xf32>
    %125 = arith.subf %117, %124 : vector<8x32xf32>
    %126 = arith.mulf %125, %125 : vector<8x32xf32>
    %cst_46 = arith.constant dense<0.000000e+00> : vector<8xf32>
    %127 = vector.multi_reduction <add>, %126, %cst_46 [1] : vector<8x32xf32> to vector<8xf32>
    %128 = vector.shape_cast %127 : vector<8xf32> to vector<8x1xf32>
    %cst_47 = arith.constant 3.200000e+01 : f32
    %129 = vector.broadcast %cst_47 : f32 to vector<8x1xf32>
    %130 = arith.divf %128, %129 : vector<8x1xf32>
    %131 = vector.broadcast %123 : vector<8x1xf32> to vector<8x32xf32>
    %132 = arith.subf %117, %131 : vector<8x32xf32>
    %cst_48 = arith.constant 9.99999997E-7 : f32
    %133 = vector.broadcast %cst_48 : f32 to vector<8x1xf32>
    %134 = arith.addf %130, %133 : vector<8x1xf32>
    %135 = math.rsqrt %134 : vector<8x1xf32>
    %136 = vector.broadcast %135 : vector<8x1xf32> to vector<8x32xf32>
    %137 = arith.mulf %132, %136 : vector<8x32xf32>
    %138 = vector.broadcast %118 : vector<1x32xf32> to vector<8x32xf32>
    %139 = arith.mulf %137, %138 : vector<8x32xf32>
    %140 = vector.broadcast %119 : vector<1x32xf32> to vector<8x32xf32>
    %141 = arith.addf %139, %140 : vector<8x32xf32>
    %142 = arith.truncf %141 : vector<8x32xf32> to vector<8x32xbf16>
    %c0_49 = arith.constant 0 : index
    %c0_50 = arith.constant 0 : index
    %143 = vector.load %arg10[%c0_49, %c0_50] : memref<32x128xbf16, #tpu.memory_space<vmem>>, vector<32x128xbf16>
    %cst_51 = arith.constant dense<0.000000e+00> : vector<8x128xf32>
    %144 = tpu.matmul %142, %143, %cst_51 {dimension_numbers = #tpu.dot_dimension_numbers<[1], [0], [0], [1], [0, 0, 1, 1], [], []>} : vector<8x32xbf16>, vector<32x128xbf16>, vector<8x128xf32> -> vector<8x128xf32>
    %c0_52 = arith.constant 0 : index
    %c0_53 = arith.constant 0 : index
    %145 = vector.load %arg11[%c0_52, %c0_53] : memref<1x128xf32, #tpu.memory_space<vmem>>, vector<1x128xf32>
    %146 = vector.broadcast %145 : vector<1x128xf32> to vector<8x128xf32>
    %147 = arith.addf %144, %146 : vector<8x128xf32>
    %cst_54 = arith.constant 5.000000e-01 : f32
    %148 = vector.broadcast %cst_54 : f32 to vector<8x128xf32>
    %149 = arith.mulf %148, %147 : vector<8x128xf32>
    %cst_55 = arith.constant 4.471500e-02 : f32
    %150 = vector.broadcast %cst_55 : f32 to vector<8x128xf32>
    %151 = arith.mulf %150, %147 : vector<8x128xf32>
    %152 = arith.mulf %151, %147 : vector<8x128xf32>
    %153 = arith.mulf %152, %147 : vector<8x128xf32>
    %154 = arith.addf %147, %153 : vector<8x128xf32>
    %cst_56 = arith.constant 0.797884583 : f32
    %155 = vector.broadcast %cst_56 : f32 to vector<8x128xf32>
    %156 = arith.mulf %155, %154 : vector<8x128xf32>
    %157 = math.tanh %156 : vector<8x128xf32>
    %cst_57 = arith.constant 1.000000e+00 : f32
    %158 = vector.broadcast %cst_57 : f32 to vector<8x128xf32>
    %159 = arith.addf %158, %157 : vector<8x128xf32>
    %160 = arith.mulf %149, %159 : vector<8x128xf32>
    %161 = arith.truncf %160 : vector<8x128xf32> to vector<8x128xbf16>
    %c0_58 = arith.constant 0 : index
    %c0_59 = arith.constant 0 : index
    %162 = vector.load %arg12[%c0_58, %c0_59] : memref<128x32xbf16, #tpu.memory_space<vmem>>, vector<128x32xbf16>
    %cst_60 = arith.constant dense<0.000000e+00> : vector<8x32xf32>
    %163 = tpu.matmul %161, %162, %cst_60 {dimension_numbers = #tpu.dot_dimension_numbers<[1], [0], [0], [1], [0, 0, 1, 1], [], []>} : vector<8x128xbf16>, vector<128x32xbf16>, vector<8x32xf32> -> vector<8x32xf32>
    %c0_61 = arith.constant 0 : index
    %c0_62 = arith.constant 0 : index
    %164 = vector.load %arg13[%c0_61, %c0_62] : memref<1x32xf32, #tpu.memory_space<vmem>>, vector<1x32xf32>
    %165 = vector.broadcast %164 : vector<1x32xf32> to vector<8x32xf32>
    %166 = arith.addf %163, %165 : vector<8x32xf32>
    %167 = arith.addf %166, %117 : vector<8x32xf32>
    %168 = vector.shape_cast %167 : vector<8x32xf32> to vector<1x8x32xf32>
    %c0_63 = arith.constant 0 : index
    %c0_64 = arith.constant 0 : index
    %c0_65 = arith.constant 0 : index
    %169 = vector.load %arg14[%c0_63, %c0_64, %c0_65] : memref<1x8x32xf32, #tpu.memory_space<vmem>>, vector<1x8x32xf32>
    tpu.vector_store %arg14[%c0_63, %c0_64, %c0_65], %168 {strides = array<i32>} : memref<1x8x32xf32, #tpu.memory_space<vmem>>, vector<1x8x32xf32>,
    return
  }
  func.func @transform_0(%arg0: i32) -> (i32, i32, i32) {
    %c0_i32 = arith.constant 0 : i32
    %c0_i32_0 = arith.constant 0 : i32
    %c0_i32_1 = arith.constant 0 : i32
    return %arg0, %c0_i32, %c0_i32_0 : i32, i32, i32
  }
  func.func @transform_1(%arg0: i32) -> (i32, i32) {
    %c0_i32 = arith.constant 0 : i32
    %c0_i32_0 = arith.constant 0 : i32
    %c0_i32_1 = arith.constant 0 : i32
    return %c0_i32, %c0_i32_0 : i32, i32
  }
  func.func @transform_2(%arg0: i32) -> (i32, i32) {
    %c0_i32 = arith.constant 0 : i32
    %c0_i32_0 = arith.constant 0 : i32
    %c0_i32_1 = arith.constant 0 : i32
    return %c0_i32, %c0_i32_0 : i32, i32
  }
  func.func @transform_3(%arg0: i32) -> (i32, i32) {
    %c0_i32 = arith.constant 0 : i32
    %c0_i32_0 = arith.constant 0 : i32
    %c0_i32_1 = arith.constant 0 : i32
    return %c0_i32, %c0_i32_0 : i32, i32
  }
  func.func @transform_4(%arg0: i32) -> (i32, i32) {
    %c0_i32 = arith.constant 0 : i32
    %c0_i32_0 = arith.constant 0 : i32
    %c0_i32_1 = arith.constant 0 : i32
    return %c0_i32, %c0_i32_0 : i32, i32
  }
  func.func @transform_5(%arg0: i32) -> (i32, i32) {
    %c0_i32 = arith.constant 0 : i32
    %c0_i32_0 = arith.constant 0 : i32
    %c0_i32_1 = arith.constant 0 : i32
    return %c0_i32, %c0_i32_0 : i32, i32
  }
  func.func @transform_6(%arg0: i32) -> (i32, i32) {
    %c0_i32 = arith.constant 0 : i32
    %c0_i32_0 = arith.constant 0 : i32
    %c0_i32_1 = arith.constant 0 : i32
    return %c0_i32, %c0_i32_0 : i32, i32
  }
  func.func @transform_7(%arg0: i32) -> (i32, i32) {
    %c0_i32 = arith.constant 0 : i32
    %c0_i32_0 = arith.constant 0 : i32
    %c0_i32_1 = arith.constant 0 : i32
    return %c0_i32, %c0_i32_0 : i32, i32
  }
  func.func @transform_8(%arg0: i32) -> (i32, i32) {
    %c0_i32 = arith.constant 0 : i32
    %c0_i32_0 = arith.constant 0 : i32
    %c0_i32_1 = arith.constant 0 : i32
    return %c0_i32, %c0_i32_0 : i32, i32
  }
  func.func @transform_9(%arg0: i32) -> (i32, i32) {
    %c0_i32 = arith.constant 0 : i32
    %c0_i32_0 = arith.constant 0 : i32
    %c0_i32_1 = arith.constant 0 : i32
    return %c0_i32, %c0_i32_0 : i32, i32
  }
  func.func @transform_10(%arg0: i32) -> (i32, i32) {
    %c0_i32 = arith.constant 0 : i32
    %c0_i32_0 = arith.constant 0 : i32
    %c0_i32_1 = arith.constant 0 : i32
    return %c0_i32, %c0_i32_0 : i32, i32
  }
  func.func @transform_11(%arg0: i32) -> (i32, i32) {
    %c0_i32 = arith.constant 0 : i32
    %c0_i32_0 = arith.constant 0 : i32
    %c0_i32_1 = arith.constant 0 : i32
    return %c0_i32, %c0_i32_0 : i32, i32
  }
  func.func @transform_12(%arg0: i32) -> (i32, i32) {
    %c0_i32 = arith.constant 0 : i32
    %c0_i32_0 = arith.constant 0 : i32
    %c0_i32_1 = arith.constant 0 : i32
    return %c0_i32, %c0_i32_0 : i32, i32
  }
  func.func @transform_13(%arg0: i32) -> (i32, i32, i32) {
    %c0_i32 = arith.constant 0 : i32
    %c0_i32_0 = arith.constant 0 : i32
    %c0_i32_1 = arith.constant 0 : i32
    return %arg0, %c0_i32, %c0_i32_0 : i32, i32, i32
  }
}

</mosaic_0001>

<llo_original>
// kernel: mae_encoder_pallas.1
$region0: #{mae_encoder_pallas.1}
  #allocation0 [shape = 'u32[]', space=smem, size = 0x4, offset = 0x4, fixed_abs, tag = 'smem constant byte address 0x4 - core index']
  #allocation1 [shape = 'u32[72,128]{1,0:T(1,128)}', space=vmem, size = 0x9000, scoped, tag = 'internal scratch']
  %s0 = inlined_call_operand.vmem [shape: f32[2,8,32], index: 0, kind: input, shape index: {}]
  %s1 = inlined_call_operand.vmem [shape: f32[1,32], index: 1, kind: input, shape index: {}]
  %s2 = inlined_call_operand.vmem [shape: f32[1,32], index: 2, kind: input, shape index: {}]
  %s3 = inlined_call_operand.vmem [shape: bf16[32,96], index: 3, kind: input, shape index: {}]
  %s4 = inlined_call_operand.vmem [shape: f32[1,96], index: 4, kind: input, shape index: {}]
  %s5 = inlined_call_operand.vmem [shape: bf16[32,32], index: 5, kind: input, shape index: {}]
  %s6 = inlined_call_operand.vmem [shape: f32[1,32], index: 6, kind: input, shape index: {}]
  %s7 = inlined_call_operand.vmem [shape: f32[1,32], index: 7, kind: input, shape index: {}]
  %s8 = inlined_call_operand.vmem [shape: f32[1,32], index: 8, kind: input, shape index: {}]
  %s9 = inlined_call_operand.vmem [shape: bf16[32,128], index: 9, kind: input, shape index: {}]
  %s10 = inlined_call_operand.vmem [shape: f32[1,128], index: 10, kind: input, shape index: {}]
  %s11 = inlined_call_operand.vmem [shape: bf16[128,32], index: 11, kind: input, shape index: {}]
  %s12 = inlined_call_operand.vmem [shape: f32[1,32], index: 12, kind: input, shape index: {}]
  %s13 = inlined_call_operand.hbm [shape: f32[2,8,32], index: 13, kind: output, shape index: {}]
  %s14 = sld [smem:[#allocation0]]
  $region85: #{mae_encoder_pallas.1} parent=0
    _
  %s16 = ssub.s32 1, %s14
  %s17 = scalar_select 0, %s16, %s14
  $region1: #{mae_encoder_pallas.1} parent=0
    #allocation2 [shape = 'u8[8192]{0}', space=vmem, size = 0x2000, scoped, tag = 'output window, operand 0']
    #allocation3 [shape = 's32[2]{0}', space=sflag, size = 0x8, scoped, tag = 'scoped memory for mae_encoder_pallas.1']
    %18 = vsyncpa [#allocation3], 0
    %s19 = scalar_lea.sflag [#allocation3], 1
    %20 = vsyncpa %s19, 0
    loop: start=0, step=1, limit=4
    $region2: #{mae_encoder_pallas.1} parent=1 // loop_pre_header
      _
    $region3: #{mae_encoder_pallas.1} parent=1 // loop_header
      %s22 = sphi 0, %s26
      %p23 = scmp.ge.s32.totalorder %s22, 4
      %s32 = sphi 0, %s34
      %s35 = sphi 0, %s32
      %s36 = sphi 0, %s35
      %s52 = sphi 0, %s36
      %s56 = sphi 0, %s56
      %s58 = sphi 0, %s56
      %s59 = sphi 0, %s58
      %s73 = sphi 0, %s59
      %s77 = sphi 0, %s77
      %s79 = sphi 0, %s77
      %s80 = sphi 0, %s79
      %s94 = sphi 0, %s80
      %s98 = sphi 0, %s98
      %s100 = sphi 0, %s98
      %s101 = sphi 0, %s100
      %s115 = sphi 0, %s101
      %s119 = sphi 0, %s119
      %s121 = sphi 0, %s119
      %s122 = sphi 0, %s121
      %s136 = sphi 0, %s122
      %s140 = sphi 0, %s140
      %s142 = sphi 0, %s140
      %s143 = sphi 0, %s142
      %s157 = sphi 0, %s143
      %s161 = sphi 0, %s161
      %s163 = sphi 0, %s161
      %s164 = sphi 0, %s163
      %s178 = sphi 0, %s164
      %s182 = sphi 0, %s182
      %s184 = sphi 0, %s182
      %s185 = sphi 0, %s184
      %s199 = sphi 0, %s185
      %s203 = sphi 0, %s203
      %s205 = sphi 0, %s203
      %s206 = sphi 0, %s205
      %s220 = sphi 0, %s206
      %s224 = sphi 0, %s224
      %s226 = sphi 0, %s224
      %s227 = sphi 0, %s226
      %s241 = sphi 0, %s227
      %s245 = sphi 0, %s245
      %s247 = sphi 0, %s245
      %s248 = sphi 0, %s247
      %s262 = sphi 0, %s248
      %s266 = sphi 0, %s266
      %s268 = sphi 0, %s266
      %s269 = sphi 0, %s268
      %s283 = sphi 0, %s269
      %s287 = sphi 0, %s287
      %s289 = sphi 0, %s287
      %s290 = sphi 0, %s289
      %s304 = sphi 0, %s290
      %s310 = sphi 0, %s312
      %s313 = sphi 0, %s310
      %s314 = sphi 0, %s313
      %s330 = sphi 0, %s314
    $region4: #{mae_encoder_pallas.1} parent=1 // loop_header_branch
      %25 = sbr.rel (%p23) target = $region8
    $region5: #{mae_encoder_pallas.1} parent=1 // loop_body
      %s27 = ssub.s32 %s22, 1
      %s28 = ssub.s32 %s22, 2
      %s29 = sadd.s32 %s22, 1
      %s30 = ssub.s32 %s22, %s29
      %p31 = scmp.eq.s32.totalorder %s30, 0
      %s33 = sadd.s32 %s32, 1
      %s34 = scalar_select %p31, %s32, %s33
      %p37 = pneg %p31
      %p38 = scmp.eq.s32.totalorder %s22, 1
      %p39 = por %p37, %p38
      %p40 = scmp.ne.s32.totalorder %s32, %s35
      %p41 = scmp.eq.s32.totalorder %s22, 0
      %p42 = por %p40, %p41
      %p43 = scmp.ne.s32.totalorder %s32, %s35
      %p44 = scmp.eq.s32.totalorder %s27, 1
      %p45 = por %p43, %p44
      %p46 = scmp.ne.s32.totalorder %s35, %s36
      %p47 = scmp.eq.s32.totalorder %s27, 0
      %p48 = por %p46, %p47
      %p49 = scmp.ne.s32.totalorder %s35, %s36
      %p50 = scmp.eq.s32.totalorder %s28, 1
      %p51 = por %p49, %p50
      %p53 = scmp.ne.s32.totalorder %s36, %s52
      %p54 = scmp.eq.s32.totalorder %s28, 0
      %p55 = por %p53, %p54
      %s57 = sadd.s32 %s56, 1
      %p60 = scmp.eq.s32.totalorder %s22, 1
      %p61 = scmp.ne.s32.totalorder %s56, %s58
      %p62 = scmp.eq.s32.totalorder %s22, 0
      %p63 = por %p61, %p62
      %p64 = scmp.ne.s32.totalorder %s56, %s58
      %p65 = scmp.eq.s32.totalorder %s27, 1
      %p66 = por %p64, %p65
      %p67 = scmp.ne.s32.totalorder %s58, %s59
      %p68 = scmp.eq.s32.totalorder %s27, 0
      %p69 = por %p67, %p68
      %p70 = scmp.ne.s32.totalorder %s58, %s59
      %p71 = scmp.eq.s32.totalorder %s28, 1
      %p72 = por %p70, %p71
      %p74 = scmp.ne.s32.totalorder %s59, %s73
      %p75 = scmp.eq.s32.totalorder %s28, 0
      %p76 = por %p74, %p75
      %s78 = sadd.s32 %s77, 1
      %p81 = scmp.eq.s32.totalorder %s22, 1
      %p82 = scmp.ne.s32.totalorder %s77, %s79
      %p83 = scmp.eq.s32.totalorder %s22, 0
      %p84 = por %p82, %p83
      %p85 = scmp.ne.s32.totalorder %s77, %s79
      %p86 = scmp.eq.s32.totalorder %s27, 1
      %p87 = por %p85, %p86
      %p88 = scmp.ne.s32.totalorder %s79, %s80
      %p89 = scmp.eq.s32.totalorder %s27, 0
      %p90 = por %p88, %p89
      %p91 = scmp.ne.s32.totalorder %s79, %s80
      %p92 = scmp.eq.s32.totalorder %s28, 1
      %p93 = por %p91, %p92
      %p95 = scmp.ne.s32.totalorder %s80, %s94
      %p96 = scmp.eq.s32.totalorder %s28, 0
      %p97 = por %p95, %p96
      %s99 = sadd.s32 %s98, 1
      %p102 = scmp.eq.s32.totalorder %s22, 1
      %p103 = scmp.ne.s32.totalorder %s98, %s100
      %p104 = scmp.eq.s32.totalorder %s22, 0
      %p105 = por %p103, %p104
      %p106 = scmp.ne.s32.totalorder %s98, %s100
      %p107 = scmp.eq.s32.totalorder %s27, 1
      %p108 = por %p106, %p107
      %p109 = scmp.ne.s32.totalorder %s100, %s101
      %p110 = scmp.eq.s32.totalorder %s27, 0
      %p111 = por %p109, %p110
      %p112 = scmp.ne.s32.totalorder %s100, %s101
      %p113 = scmp.eq.s32.totalorder %s28, 1
      %p114 = por %p112, %p113
      %p116 = scmp.ne.s32.totalorder %s101, %s115
      %p117 = scmp.eq.s32.totalorder %s28, 0
      %p118 = por %p116, %p117
      %s120 = sadd.s32 %s119, 1
      %p123 = scmp.eq.s32.totalorder %s22, 1
      %p124 = scmp.ne.s32.totalorder %s119, %s121
      %p125 = scmp.eq.s32.totalorder %s22, 0
      %p126 = por %p124, %p125
      %p127 = scmp.ne.s32.totalorder %s119, %s121
      %p128 = scmp.eq.s32.totalorder %s27, 1
      %p129 = por %p127, %p128
      %p130 = scmp.ne.s32.totalorder %s121, %s122
      %p131 = scmp.eq.s32.totalorder %s27, 0
      %p132 = por %p130, %p131
      %p133 = scmp.ne.s32.totalorder %s121, %s122
      %p134 = scmp.eq.s32.totalorder %s28, 1
      %p135 = por %p133, %p134
      %p137 = scmp.ne.s32.totalorder %s122, %s136
      %p138 = scmp.eq.s32.totalorder %s28, 0
      %p139 = por %p137, %p138
      %s141 = sadd.s32 %s140, 1
      %p144 = scmp.eq.s32.totalorder %s22, 1
      %p145 = scmp.ne.s32.totalorder %s140, %s142
      %p146 = scmp.eq.s32.totalorder %s22, 0
      %p147 = por %p145, %p146
      %p148 = scmp.ne.s32.totalorder %s140, %s142
      %p149 = scmp.eq.s32.totalorder %s27, 1
      %p150 = por %p148, %p149
      %p151 = scmp.ne.s32.totalorder %s142, %s143
      %p152 = scmp.eq.s32.totalorder %s27, 0
      %p153 = por %p151, %p152
      %p154 = scmp.ne.s32.totalorder %s142, %s143
      %p155 = scmp.eq.s32.totalorder %s28, 1
      %p156 = por %p154, %p155
      %p158 = scmp.ne.s32.totalorder %s143, %s157
      %p159 = scmp.eq.s32.totalorder %s28, 0
      %p160 = por %p158, %p159
      %s162 = sadd.s32 %s161, 1
      %p165 = scmp.eq.s32.totalorder %s22, 1
      %p166 = scmp.ne.s32.totalorder %s161, %s163
      %p167 = scmp.eq.s32.totalorder %s22, 0
      %p168 = por %p166, %p167
      %p169 = scmp.ne.s32.totalorder %s161, %s163
      %p170 = scmp.eq.s32.totalorder %s27, 1
      %p171 = por %p169, %p170
      %p172 = scmp.ne.s32.totalorder %s163, %s164
      %p173 = scmp.eq.s32.totalorder %s27, 0
      %p174 = por %p172, %p173
      %p175 = scmp.ne.s32.totalorder %s163, %s164
      %p176 = scmp.eq.s32.totalorder %s28, 1
      %p177 = por %p175, %p176
      %p179 = scmp.ne.s32.totalorder %s164, %s178
      %p180 = scmp.eq.s32.totalorder %s28, 0
      %p181 = por %p179, %p180
      %s183 = sadd.s32 %s182, 1
      %p186 = scmp.eq.s32.totalorder %s22, 1
      %p187 = scmp.ne.s32.totalorder %s182, %s184
      %p188 = scmp.eq.s32.totalorder %s22, 0
      %p189 = por %p187, %p188
      %p190 = scmp.ne.s32.totalorder %s182, %s184
      %p191 = scmp.eq.s32.totalorder %s27, 1
      %p192 = por %p190, %p191
      %p193 = scmp.ne.s32.totalorder %s184, %s185
      %p194 = scmp.eq.s32.totalorder %s27, 0
      %p195 = por %p193, %p194
      %p196 = scmp.ne.s32.totalorder %s184, %s185
      %p197 = scmp.eq.s32.totalorder %s28, 1
      %p198 = por %p196, %p197
      %p200 = scmp.ne.s32.totalorder %s185, %s199
      %p201 = scmp.eq.s32.totalorder %s28, 0
      %p202 = por %p200, %p201
      %s204 = sadd.s32 %s203, 1
      %p207 = scmp.eq.s32.totalorder %s22, 1
      %p208 = scmp.ne.s32.totalorder %s203, %s205
      %p209 = scmp.eq.s32.totalorder %s22, 0
      %p210 = por %p208, %p209
      %p211 = scmp.ne.s32.totalorder %s203, %s205
      %p212 = scmp.eq.s32.totalorder %s27, 1
      %p213 = por %p211, %p212
      %p214 = scmp.ne.s32.totalorder %s205, %s206
      %p215 = scmp.eq.s32.totalorder %s27, 0
      %p216 = por %p214, %p215
      %p217 = scmp.ne.s32.totalorder %s205, %s206
      %p218 = scmp.eq.s32.totalorder %s28, 1
      %p219 = por %p217, %p218
      %p221 = scmp.ne.s32.totalorder %s206, %s220
      %p222 = scmp.eq.s32.totalorder %s28, 0
      %p223 = por %p221, %p222
      %s225 = sadd.s32 %s224, 1
      %p228 = scmp.eq.s32.totalorder %s22, 1
      %p229 = scmp.ne.s32.totalorder %s224, %s226
      %p230 = scmp.eq.s32.totalorder %s22, 0
      %p231 = por %p229, %p230
      %p232 = scmp.ne.s32.totalorder %s224, %s226
      %p233 = scmp.eq.s32.totalorder %s27, 1
      %p234 = por %p232, %p233
      %p235 = scmp.ne.s32.totalorder %s226, %s227
      %p236 = scmp.eq.s32.totalorder %s27, 0
      %p237 = por %p235, %p236
      %p238 = scmp.ne.s32.totalorder %s226, %s227
      %p239 = scmp.eq.s32.totalorder %s28, 1
      %p240 = por %p238, %p239
      %p242 = scmp.ne.s32.totalorder %s227, %s241
      %p243 = scmp.eq.s32.totalorder %s28, 0
      %p244 = por %p242, %p243
      %s246 = sadd.s32 %s245, 1
      %p249 = scmp.eq.s32.totalorder %s22, 1
      %p250 = scmp.ne.s32.totalorder %s245, %s247
      %p251 = scmp.eq.s32.totalorder %s22, 0
      %p252 = por %p250, %p251
      %p253 = scmp.ne.s32.totalorder %s245, %s247
      %p254 = scmp.eq.s32.totalorder %s27, 1
      %p255 = por %p253, %p254
      %p256 = scmp.ne.s32.totalorder %s247, %s248
      %p257 = scmp.eq.s32.totalorder %s27, 0
      %p258 = por %p256, %p257
      %p259 = scmp.ne.s32.totalorder %s247, %s248
      %p260 = scmp.eq.s32.totalorder %s28, 1
      %p261 = por %p259, %p260
      %p263 = scmp.ne.s32.totalorder %s248, %s262
      %p264 = scmp.eq.s32.totalorder %s28, 0
      %p265 = por %p263, %p264
      %s267 = sadd.s32 %s266, 1
      %p270 = scmp.eq.s32.totalorder %s22, 1
      %p271 = scmp.ne.s32.totalorder %s266, %s268
      %p272 = scmp.eq.s32.totalorder %s22, 0
      %p273 = por %p271, %p272
      %p274 = scmp.ne.s32.totalorder %s266, %s268
      %p275 = scmp.eq.s32.totalorder %s27, 1
      %p276 = por %p274, %p275
      %p277 = scmp.ne.s32.totalorder %s268, %s269
      %p278 = scmp.eq.s32.totalorder %s27, 0
      %p279 = por %p277, %p278
      %p280 = scmp.ne.s32.totalorder %s268, %s269
      %p281 = scmp.eq.s32.totalorder %s28, 1
      %p282 = por %p280, %p281
      %p284 = scmp.ne.s32.totalorder %s269, %s283
      %p285 = scmp.eq.s32.totalorder %s28, 0
      %p286 = por %p284, %p285
      %s288 = sadd.s32 %s287, 1
      %p291 = scmp.eq.s32.totalorder %s22, 1
      %p292 = scmp.ne.s32.totalorder %s287, %s289
      %p293 = scmp.eq.s32.totalorder %s22, 0
      %p294 = por %p292, %p293
      %p295 = scmp.ne.s32.totalorder %s287, %s289
      %p296 = scmp.eq.s32.totalorder %s27, 1
      %p297 = por %p295, %p296
      %p298 = scmp.ne.s32.totalorder %s289, %s290
      %p299 = scmp.eq.s32.totalorder %s27, 0
      %p300 = por %p298, %p299
      %p301 = scmp.ne.s32.totalorder %s289, %s290
      %p302 = scmp.eq.s32.totalorder %s28, 1
      %p303 = por %p301, %p302
      %p305 = scmp.ne.s32.totalorder %s290, %s304
      %p306 = scmp.eq.s32.totalorder %s28, 0
      %p307 = por %p305, %p306
      %s308 = ssub.s32 %s22, %s29
      %p309 = scmp.eq.s32.totalorder %s308, 0
      %s311 = sadd.s32 %s310, 1
      %s312 = scalar_select %p309, %s310, %s311
      %p315 = pneg %p309
      %p316 = scmp.eq.s32.totalorder %s22, 1
      %p317 = por %p315, %p316
      %p318 = scmp.ne.s32.totalorder %s310, %s313
      %p319 = scmp.eq.s32.totalorder %s22, 0
      %p320 = por %p318, %p319
      %p321 = scmp.ne.s32.totalorder %s310, %s313
      %p322 = scmp.eq.s32.totalorder %s27, 1
      %p323 = por %p321, %p322
      %p324 = scmp.ne.s32.totalorder %s313, %s314
      %p325 = scmp.eq.s32.totalorder %s27, 0
      %p326 = por %p324, %p325
      %p327 = scmp.ne.s32.totalorder %s313, %s314
      %p328 = scmp.eq.s32.totalorder %s28, 1
      %p329 = por %p327, %p328
      %p331 = scmp.ne.s32.totalorder %s314, %s330
      %p332 = scmp.eq.s32.totalorder %s28, 0
      %p333 = por %p331, %p332
      %p334 = scmp.le.s32.totalorder 1, %s22
      %p335 = scmp.lt.s32.totalorder %s22, 3
      %p336 = pnand %p334, %p335
      %p337 = pneg %p336
      // Predicated region
      $region9: #{mae_encoder_pallas.1} parent=5 // pred_check
        _
      $region10: #{mae_encoder_pallas.1} parent=5 // pred_check_branch
        %339 = sbr.rel (%p336) target = $region12
      $region11: #{mae_encoder_pallas.1} parent=5 // pred_region
        %s340 = ssub.s32 %s22, 1
        // Predicated region
        $region13: #{mae_encoder_pallas.1} parent=11 // pred_check
          %p341 = pneg %p69
        $region14: #{mae_encoder_pallas.1} parent=11 // pred_check_branch
          %343 = sbr.rel (%p341) target = $region16
        $region15: #{mae_encoder_pallas.1} parent=11 // pred_region
          _
        $region16: #{mae_encoder_pallas.1} parent=11 // pred_fallthru
          _
        // Predicated region
        $region17: #{mae_encoder_pallas.1} parent=11 // pred_check
          %p344 = pneg %p90
        $region18: #{mae_encoder_pallas.1} parent=11 // pred_check_branch
          %346 = sbr.rel (%p344) target = $region20
        $region19: #{mae_encoder_pallas.1} parent=11 // pred_region
          _
        $region20: #{mae_encoder_pallas.1} parent=11 // pred_fallthru
          _
        // Predicated region
        $region21: #{mae_encoder_pallas.1} parent=11 // pred_check
          %p347 = pneg %p111
        $region22: #{mae_encoder_pallas.1} parent=11 // pred_check_branch
          %349 = sbr.rel (%p347) target = $region24
        $region23: #{mae_encoder_pallas.1} parent=11 // pred_region
          _
        $region24: #{mae_encoder_pallas.1} parent=11 // pred_fallthru
          _
        // Predicated region
        $region25: #{mae_encoder_pallas.1} parent=11 // pred_check
          %p350 = pneg %p132
        $region26: #{mae_encoder_pallas.1} parent=11 // pred_check_branch
          %352 = sbr.rel (%p350) target = $region28
        $region27: #{mae_encoder_pallas.1} parent=11 // pred_region
          _
        $region28: #{mae_encoder_pallas.1} parent=11 // pred_fallthru
          _
        // Predicated region
        $region29: #{mae_encoder_pallas.1} parent=11 // pred_check
          %p353 = pneg %p153
        $region30: #{mae_encoder_pallas.1} parent=11 // pred_check_branch
          %355 = sbr.rel (%p353) target = $region32
        $region31: #{mae_encoder_pallas.1} parent=11 // pred_region
          _
        $region32: #{mae_encoder_pallas.1} parent=11 // pred_fallthru
          _
        // Predicated region
        $region33: #{mae_encoder_pallas.1} parent=11 // pred_check
          %p356 = pneg %p174
        $region34: #{mae_encoder_pallas.1} parent=11 // pred_check_branch
          %358 = sbr.rel (%p356) target = $region36
        $region35: #{mae_encoder_pallas.1} parent=11 // pred_region
          _
        $region36: #{mae_encoder_pallas.1} parent=11 // pred_fallthru
          _
        // Predicated region
        $region37: #{mae_encoder_pallas.1} parent=11 // pred_check
          %p359 = pneg %p195
        $region38: #{mae_encoder_pallas.1} parent=11 // pred_check_branch
          %361 = sbr.rel (%p359) target = $region40
        $region39: #{mae_encoder_pallas.1} parent=11 // pred_region
          _
        $region40: #{mae_encoder_pallas.1} parent=11 // pred_fallthru
          _
        // Predicated region
        $region41: #{mae_encoder_pallas.1} parent=11 // pred_check
          %p362 = pneg %p216
        $region42: #{mae_encoder_pallas.1} parent=11 // pred_check_branch
          %364 = sbr.rel (%p362) target = $region44
        $region43: #{mae_encoder_pallas.1} parent=11 // pred_region
          _
        $region44: #{mae_encoder_pallas.1} parent=11 // pred_fallthru
          _
        // Predicated region
        $region45: #{mae_encoder_pallas.1} parent=11 // pred_check
          %p365 = pneg %p237
        $region46: #{mae_encoder_pallas.1} parent=11 // pred_check_branch
          %367 = sbr.rel (%p365) target = $region48
        $region47: #{mae_encoder_pallas.1} parent=11 // pred_region
          _
        $region48: #{mae_encoder_pallas.1} parent=11 // pred_fallthru
          _
        // Predicated region
        $region49: #{mae_encoder_pallas.1} parent=11 // pred_check
          %p368 = pneg %p258
        $region50: #{mae_encoder_pallas.1} parent=11 // pred_check_branch
          %370 = sbr.rel (%p368) target = $region52
        $region51: #{mae_encoder_pallas.1} parent=11 // pred_region
          _
        $region52: #{mae_encoder_pallas.1} parent=11 // pred_fallthru
          _
        // Predicated region
        $region53: #{mae_encoder_pallas.1} parent=11 // pred_check
          %p371 = pneg %p279
        $region54: #{mae_encoder_pallas.1} parent=11 // pred_check_branch
          %373 = sbr.rel (%p371) target = $region56
        $region55: #{mae_encoder_pallas.1} parent=11 // pred_region
          _
        $region56: #{mae_encoder_pallas.1} parent=11 // pred_fallthru
          _
        // Predicated region
        $region57: #{mae_encoder_pallas.1} parent=11 // pred_check
          %p374 = pneg %p300
        $region58: #{mae_encoder_pallas.1} parent=11 // pred_check_branch
          %376 = sbr.rel (%p374) target = $region60
        $region59: #{mae_encoder_pallas.1} parent=11 // pred_region
          _
        $region60: #{mae_encoder_pallas.1} parent=11 // pred_fallthru
          _
      $region12: #{mae_encoder_pallas.1} parent=5 // pred_fallthru
        _
      %p377 = scmp.lt.s32.totalorder %s22, 2
      // Predicated region
      $region61: #{mae_encoder_pallas.1} parent=5 // pred_check
        %p378 = pneg %p377
      $region62: #{mae_encoder_pallas.1} parent=5 // pred_check_branch
        %380 = sbr.rel (%p378) target = $region64
      $region63: #{mae_encoder_pallas.1} parent=5 // pred_region
        // Predicated region
        $region65: #{mae_encoder_pallas.1} parent=63 // pred_check
          %p381 = pneg %p42
        $region66: #{mae_encoder_pallas.1} parent=63 // pred_check_branch
          %383 = sbr.rel (%p381) target = $region68
        $region67: #{mae_encoder_pallas.1} parent=63 // pred_region
          %p384 = scmp.lt.s32.totalorder %s22, 1
          %s385 = scalar_select %p384, %s22, 1
          %s386 = smul.addr %s385, 8
          %s387 = scalar_lea.vmem %s0, %s386
        $region68: #{mae_encoder_pallas.1} parent=63 // pred_fallthru
          _
      $region64: #{mae_encoder_pallas.1} parent=5 // pred_fallthru
        _
      %p388 = scmp.le.s32.totalorder 1, %s22
      %p389 = scmp.lt.s32.totalorder %s22, 3
      %p390 = pnand %p388, %p389
      %p391 = pneg %p390
      // Predicated region
      $region69: #{mae_encoder_pallas.1} parent=5 // pred_check
        _
      $region70: #{mae_encoder_pallas.1} parent=5 // pred_check_branch
        %393 = sbr.rel (%p390) target = $region72
      $region71: #{mae_encoder_pallas.1} parent=5 // pred_region
        %s394 = ssub.s32 %s22, 1
        %p395 = scmp.lt.s32.totalorder %s27, 1
        %s396 = scalar_select %p395, %s27, 1
        %s397 = smul.addr %s396, 8
        %s398 = scalar_lea.vmem %s0, %s397
        %p399 = pneg %p48
        %p400 = pneg %p45
        %p401 = pneg %p69
        %p402 = pneg %p66
        %p403 = pneg %p90
        %p404 = pneg %p87
        %p405 = pneg %p111
        %p406 = pneg %p108
        %p407 = pneg %p132
        %p408 = pneg %p129
        %p409 = pneg %p153
        %p410 = pneg %p150
        %p411 = pneg %p174
        %p412 = pneg %p171
        %p413 = pneg %p195
        %p414 = pneg %p192
        %p415 = pneg %p216
        %p416 = pneg %p213
        %p417 = pneg %p237
        %p418 = pneg %p234
        %p419 = pneg %p258
        %p420 = pneg %p255
        %p421 = pneg %p279
        %p422 = pneg %p276
        %p423 = pneg %p300
        %p424 = pneg %p297
        %p425 = pneg %p326
        %p426 = pneg %p323
        %s427 = sand.u32 %s313, 1
        %s428 = scalar_lea.sflag [#allocation3], %s427
        %s429 = sand.u32 %s313, 1
        %s430 = smul.addr %s429, 8
        %s431 = scalar_lea.vmem [#allocation2], %s430
        %p432 = scmp.lt.s32.totalorder %s27, 1
        %s433 = scalar_select %p432, %s27, 1
        %s434 = smul.addr %s433, 8
        %s435 = scalar_lea.vmem %s0, %s434
        %v437 = vld [vmem:[%s435] sm:$0xff]
        %v438 = vld [vmem:[%s1] sm:$0x1]
        %v439 = vld [vmem:[%s2] sm:$0x1]
        %vm440 = vcmask 261120
        %v441 = vsel %vm440, %v437, 0.0
        %442 = vadd.xlane.f32.xlu0 %v441
        %v443 = vpop.xlane.xlu0 %442
        %v444 = vrcp.pop 32.0
        %v445 = vmul.f32 32.0, %v444
        %v446 = vsub.f32 1.0, %v445
        %v447 = vmul.f32 %v444, %v446
        %v448 = vadd.f32 %v444, %v447
        %vm449 = vweird.f32 %v444
        %v450 = vsel %vm449, %v444, %v448
        %v451 = vmul.f32 %v443, %v450
        %v452 = vsub.f32 %v437, %v451
        %v453 = vmul.f32 %v452, %v452
        %v454 = vsel %vm440, %v453, 0.0
        %455 = vadd.xlane.f32.xlu0 %v454
        %v456 = vpop.xlane.xlu0 %455
        %v457 = vmul.f32 %v456, %v450
        %v458 = vadd.f32 %v457, 1e-06
        %v459 = vrsqrt.pop %v458
        %v460 = vmul.f32 %v459, %v458
        %v461 = vmul.f32 %v460, %v459
        %v462 = vmul.f32 0.5, %v461
        %v463 = vsub.f32 1.5, %v462
        %v464 = vmul.f32 %v459, %v463
        %vm465 = vweird.f32 %v458
        %vm466 = vweird.f32 %v459
        %vm467 = vmor %vm465, %vm466
        %v468 = vsel %vm467, %v459, %v464
        %v469 = vmul.f32 %v452, %v468
        %v471 = vperm.slane %v438, 0
        %v473 = vmul.f32 %v469, %v471
        %v475 = vperm.slane %v439, 0
        %v477 = vadd.f32 %v473, %v475
        %v478 = vpack.c.bf16 %v477, %v477
        %v479 = vld [vmem:[%s3] sm:$0xf]
        %v480 = vld [vmem:[%s3 + $0x4] sm:$0xf]
        %v481 = vld [vmem:[%s3 + $0x8] sm:$0xf]
        %v482 = vld [vmem:[%s3 + $0xc] sm:$0xf]
        %v483 = vld [vmem:[%s4] sm:$0x1]
        %v485 = vperm.slane %v483, 0
        %v491 = vunpack.c.l.b16 %v479
        %v492 = vunpack.c.l.b16 %v480
        %v493 = vunpack.c.l.b16 %v481
        %v494 = vunpack.c.l.b16 %v482
        %v495 = vpack.c.b16 %v492, %v491
        %v496 = vpack.c.b16 %v494, %v493
        %v500 = vsel %vm440, %v478, 0
        %502 = vmatpush.bf16.msra.mxu0 0
        %503 = vmatpush.bf16.msra.mxu0 0
        %504 = vmatpush.bf16.msra.mxu0 0
        %505 = vmatpush.bf16.msra.mxu0 0
        %506 = vmatpush.bf16.msra.mxu0 0
        %507 = vmatpush.bf16.msra.mxu0 0
        %508 = vmatpush.bf16.msra.mxu0 %v496
        %509 = vmatpush.bf16.msra.mxu0 %v495
        %510 = vmatmul.bf16.gmra.mxu0 %v500
        %v511 = vpop.f32.mrf.mxu0
        %v512 = vadd.f32 %v485, %v511
        %v513 = vpop.f32.mrf.mxu0
        %514 = vdwg.mxu0
        %v515 = vpack.c.bf16 %v512, %v512
        %v517 = vunpack.c.l.b16 %v515
        %v518 = vpack.c.b16 %v517, %v517
        %519 = vrot.lane.b32.xlu0 %v518, 96
        %v520 = vpop.permute.xlu0 %519
        %vm521 = vcmask 64512
        %v523 = vsel %vm521, %v515, 0
        %v526 = vsel %vm521, %v520, 0
        %528 = vmatpush.bf16.xpose.msra.mxu0 0
        %529 = vmatpush.bf16.xpose.msra.mxu0 0
        %530 = vmatpush.bf16.xpose.msra.mxu0 0
        %531 = vmatpush.bf16.xpose.msra.mxu0 0
        %532 = vmatpush.bf16.xpose.msra.mxu0 0
        %533 = vmatpush.bf16.xpose.msra.mxu0 0
        %534 = vmatpush.bf16.xpose.msra.mxu0 0
        %535 = vmatpush.bf16.xpose.msra.mxu0 %v526
        %536 = vmatmul.bf16.gmra.mxu0 %v523
        %v537 = vpop.f32.mrf.mxu0
        %v538 = vadd.f32 0.0, %v537
        %v539 = vpop.f32.mrf.mxu0
        %540 = vdwg.mxu0
        %v541 = vsel %vm521, %v538, -inf
        %542 = vmax.xlane.f32.xlu0 %v541
        %v543 = vpop.xlane.xlu0 %542
        %v544 = vsub.f32 %v538, %v543
        %v545 = vmul.f32 %v544, 1.442695
        %v546 = vpow.pop %v545
        %v547 = vsel %vm521, %v546, 0.0
        %548 = vadd.xlane.f32.xlu0 %v547
        %v549 = vpop.xlane.xlu0 %548
        %v550 = vrcp.pop %v549
        %v551 = vmul.f32 %v549, %v550
        %v552 = vsub.f32 1.0, %v551
        %v553 = vmul.f32 %v550, %v552
        %v554 = vadd.f32 %v550, %v553
        %vm555 = vweird.f32 %v549
        %vm556 = vweird.f32 %v550
        %vm557 = vmor %vm555, %vm556
        %v558 = vsel %vm557, %v550, %v554
        %v559 = vand.u32 2147483647, %v549
        %vm560 = vcmp.eq.f32.partialorder %v559, 8.507059e+37
        %v561 = vand.u32 %v549, 2147483648
        %v562 = vor.u32 1.1754944e-38, %v561
        %v563 = vsel %vm560, %v562, %v558
        %v564 = vmul.f32 1.0, %v563
        %v565 = vmul.f32 %v546, %v564
        %v566 = vpack.c.bf16 %v565, %v565
        %567 = vrot.lane.b32.xlu0 %v518, 64
        %v568 = vpop.permute.xlu0 %567
        %v570 = vsel %vm521, %v566, 0
        %vm572 = vcmask 1043456
        %v574 = vsel %vm572, %v568, 0
        %576 = vmatpush.bf16.msra.mxu0 0
        %577 = vmatpush.bf16.msra.mxu0 0
        %578 = vmatpush.bf16.msra.mxu0 0
        %579 = vmatpush.bf16.msra.mxu0 0
        %580 = vmatpush.bf16.msra.mxu0 0
        %581 = vmatpush.bf16.msra.mxu0 0
        %582 = vmatpush.bf16.msra.mxu0 0
        %583 = vmatpush.bf16.msra.mxu0 %v574
        %584 = vmatmul.bf16.gmra.mxu0 %v570
        %v585 = vpop.f32.mrf.mxu0
        %v586 = vadd.f32 0.0, %v585
        %v587 = vpop.f32.mrf.mxu0
        %588 = vdwg.mxu0
        %589 = vrot.lane.b32.xlu0 %v518, 120
        %v590 = vpop.permute.xlu0 %589
        %591 = vrot.lane.b32.xlu0 %v518, 88
        %v592 = vpop.permute.xlu0 %591
        %v594 = vsel %vm521, %v590, 0
        %v597 = vsel %vm521, %v592, 0
        %599 = vmatpush.bf16.xpose.msra.mxu0 0
        %600 = vmatpush.bf16.xpose.msra.mxu0 0
        %601 = vmatpush.bf16.xpose.msra.mxu0 0
        %602 = vmatpush.bf16.xpose.msra.mxu0 0
        %603 = vmatpush.bf16.xpose.msra.mxu0 0
        %604 = vmatpush.bf16.xpose.msra.mxu0 0
        %605 = vmatpush.bf16.xpose.msra.mxu0 0
        %606 = vmatpush.bf16.xpose.msra.mxu0 %v597
        %607 = vmatmul.bf16.gmra.mxu0 %v594
        %v608 = vpop.f32.mrf.mxu0
        %v609 = vadd.f32 0.0, %v608
        %v610 = vpop.f32.mrf.mxu0
        %611 = vdwg.mxu0
        %v612 = vsel %vm521, %v609, -inf
        %613 = vmax.xlane.f32.xlu0 %v612
        %v614 = vpop.xlane.xlu0 %613
        %v615 = vsub.f32 %v609, %v614
        %v616 = vmul.f32 %v615, 1.442695
        %v617 = vpow.pop %v616
        %v618 = vsel %vm521, %v617, 0.0
        %619 = vadd.xlane.f32.xlu0 %v618
        %v620 = vpop.xlane.xlu0 %619
        %v621 = vrcp.pop %v620
        %v622 = vmul.f32 %v620, %v621
        %v623 = vsub.f32 1.0, %v622
        %v624 = vmul.f32 %v621, %v623
        %v625 = vadd.f32 %v621, %v624
        %vm626 = vweird.f32 %v620
        %vm627 = vweird.f32 %v621
        %vm628 = vmor %vm626, %vm627
        %v629 = vsel %vm628, %v621, %v625
        %v630 = vand.u32 2147483647, %v620
        %vm631 = vcmp.eq.f32.partialorder %v630, 8.507059e+37
        %v632 = vand.u32 %v620, 2147483648
        %v633 = vor.u32 1.1754944e-38, %v632
        %v634 = vsel %vm631, %v633, %v629
        %v635 = vmul.f32 1.0, %v634
        %v636 = vmul.f32 %v617, %v635
        %v637 = vpack.c.bf16 %v636, %v636
        %638 = vrot.lane.b32.xlu0 %v518, 56
        %v639 = vpop.permute.xlu0 %638
        %v641 = vsel %vm521, %v637, 0
        %v644 = vsel %vm572, %v639, 0
        %646 = vmatpush.bf16.msra.mxu0 0
        %647 = vmatpush.bf16.msra.mxu0 0
        %648 = vmatpush.bf16.msra.mxu0 0
        %649 = vmatpush.bf16.msra.mxu0 0
        %650 = vmatpush.bf16.msra.mxu0 0
        %651 = vmatpush.bf16.msra.mxu0 0
        %652 = vmatpush.bf16.msra.mxu0 0
        %653 = vmatpush.bf16.msra.mxu0 %v644
        %654 = vmatmul.bf16.gmra.mxu0 %v641
        %v655 = vpop.f32.mrf.mxu0
        %v656 = vadd.f32 0.0, %v655
        %v657 = vpop.f32.mrf.mxu0
        %658 = vdwg.mxu0
        %659 = vrot.lane.b32.xlu0 %v518, 112
        %v660 = vpop.permute.xlu0 %659
        %661 = vrot.lane.b32.xlu0 %v518, 80
        %v662 = vpop.permute.xlu0 %661
        %v664 = vsel %vm521, %v660, 0
        %v667 = vsel %vm521, %v662, 0
        %669 = vmatpush.bf16.xpose.msra.mxu0 0
        %670 = vmatpush.bf16.xpose.msra.mxu0 0
        %671 = vmatpush.bf16.xpose.msra.mxu0 0
        %672 = vmatpush.bf16.xpose.msra.mxu0 0
        %673 = vmatpush.bf16.xpose.msra.mxu0 0
        %674 = vmatpush.bf16.xpose.msra.mxu0 0
        %675 = vmatpush.bf16.xpose.msra.mxu0 0
        %676 = vmatpush.bf16.xpose.msra.mxu0 %v667
        %677 = vmatmul.bf16.gmra.mxu0 %v664
        %v678 = vpop.f32.mrf.mxu0
        %v679 = vadd.f32 0.0, %v678
        %v680 = vpop.f32.mrf.mxu0
        %681 = vdwg.mxu0
        %v682 = vsel %vm521, %v679, -inf
        %683 = vmax.xlane.f32.xlu0 %v682
        %v684 = vpop.xlane.xlu0 %683
        %v685 = vsub.f32 %v679, %v684
        %v686 = vmul.f32 %v685, 1.442695
        %v687 = vpow.pop %v686
        %v688 = vsel %vm521, %v687, 0.0
        %689 = vadd.xlane.f32.xlu0 %v688
        %v690 = vpop.xlane.xlu0 %689
        %v691 = vrcp.pop %v690
        %v692 = vmul.f32 %v690, %v691
        %v693 = vsub.f32 1.0, %v692
        %v694 = vmul.f32 %v691, %v693
        %v695 = vadd.f32 %v691, %v694
        %vm696 = vweird.f32 %v690
        %vm697 = vweird.f32 %v691
        %vm698 = vmor %vm696, %vm697
        %v699 = vsel %vm698, %v691, %v695
        %v700 = vand.u32 2147483647, %v690
        %vm701 = vcmp.eq.f32.partialorder %v700, 8.507059e+37
        %v702 = vand.u32 %v690, 2147483648
        %v703 = vor.u32 1.1754944e-38, %v702
        %v704 = vsel %vm701, %v703, %v699
        %v705 = vmul.f32 1.0, %v704
        %v706 = vmul.f32 %v687, %v705
        %v707 = vpack.c.bf16 %v706, %v706
        %708 = vrot.lane.b32.xlu0 %v518, 48
        %v709 = vpop.permute.xlu0 %708
        %v711 = vsel %vm521, %v707, 0
        %v714 = vsel %vm572, %v709, 0
        %716 = vmatpush.bf16.msra.mxu0 0
        %717 = vmatpush.bf16.msra.mxu0 0
        %718 = vmatpush.bf16.msra.mxu0 0
        %719 = vmatpush.bf16.msra.mxu0 0
        %720 = vmatpush.bf16.msra.mxu0 0
        %721 = vmatpush.bf16.msra.mxu0 0
        %722 = vmatpush.bf16.msra.mxu0 0
        %723 = vmatpush.bf16.msra.mxu0 %v714
        %724 = vmatmul.bf16.gmra.mxu0 %v711
        %v725 = vpop.f32.mrf.mxu0
        %v726 = vadd.f32 0.0, %v725
        %v727 = vpop.f32.mrf.mxu0
        %728 = vdwg.mxu0
        %729 = vrot.lane.b32.xlu0 %v518, 104
        %v730 = vpop.permute.xlu0 %729
        %731 = vrot.lane.b32.xlu0 %v518, 72
        %v732 = vpop.permute.xlu0 %731
        %v734 = vsel %vm521, %v730, 0
        %v737 = vsel %vm521, %v732, 0
        %739 = vmatpush.bf16.xpose.msra.mxu0 0
        %740 = vmatpush.bf16.xpose.msra.mxu0 0
        %741 = vmatpush.bf16.xpose.msra.mxu0 0
        %742 = vmatpush.bf16.xpose.msra.mxu0 0
        %743 = vmatpush.bf16.xpose.msra.mxu0 0
        %744 = vmatpush.bf16.xpose.msra.mxu0 0
        %745 = vmatpush.bf16.xpose.msra.mxu0 0
        %746 = vmatpush.bf16.xpose.msra.mxu0 %v737
        %747 = vmatmul.bf16.gmra.mxu0 %v734
        %v748 = vpop.f32.mrf.mxu0
        %v749 = vadd.f32 0.0, %v748
        %v750 = vpop.f32.mrf.mxu0
        %751 = vdwg.mxu0
        %v752 = vsel %vm521, %v749, -inf
        %753 = vmax.xlane.f32.xlu0 %v752
        %v754 = vpop.xlane.xlu0 %753
        %v755 = vsub.f32 %v749, %v754
        %v756 = vmul.f32 %v755, 1.442695
        %v757 = vpow.pop %v756
        %v758 = vsel %vm521, %v757, 0.0
        %759 = vadd.xlane.f32.xlu0 %v758
        %v760 = vpop.xlane.xlu0 %759
        %v761 = vrcp.pop %v760
        %v762 = vmul.f32 %v760, %v761
        %v763 = vsub.f32 1.0, %v762
        %v764 = vmul.f32 %v761, %v763
        %v765 = vadd.f32 %v761, %v764
        %vm766 = vweird.f32 %v760
        %vm767 = vweird.f32 %v761
        %vm768 = vmor %vm766, %vm767
        %v769 = vsel %vm768, %v761, %v765
        %v770 = vand.u32 2147483647, %v760
        %vm771 = vcmp.eq.f32.partialorder %v770, 8.507059e+37
        %v772 = vand.u32 %v760, 2147483648
        %v773 = vor.u32 1.1754944e-38, %v772
        %v774 = vsel %vm771, %v773, %v769
        %v775 = vmul.f32 1.0, %v774
        %v776 = vmul.f32 %v757, %v775
        %v777 = vpack.c.bf16 %v776, %v776
        %778 = vrot.lane.b32.xlu0 %v518, 40
        %v779 = vpop.permute.xlu0 %778
        %v781 = vsel %vm521, %v777, 0
        %v784 = vsel %vm572, %v779, 0
        %786 = vmatpush.bf16.msra.mxu0 0
        %787 = vmatpush.bf16.msra.mxu0 0
        %788 = vmatpush.bf16.msra.mxu0 0
        %789 = vmatpush.bf16.msra.mxu0 0
        %790 = vmatpush.bf16.msra.mxu0 0
        %791 = vmatpush.bf16.msra.mxu0 0
        %792 = vmatpush.bf16.msra.mxu0 0
        %793 = vmatpush.bf16.msra.mxu0 %v784
        %794 = vmatmul.bf16.gmra.mxu0 %v781
        %v795 = vpop.f32.mrf.mxu0
        %v796 = vadd.f32 0.0, %v795
        %v797 = vpop.f32.mrf.mxu0
        %798 = vdwg.mxu0
        %800 = vrot.lane.b32.xlu0 %v656, 8
        %v801 = vpop.permute.xlu0 %800
        %804 = vrot.lane.b32.xlu0 %v726, 16
        %v805 = vpop.permute.xlu0 %804
        %808 = vrot.lane.b32.xlu0 %v796, 24
        %v809 = vpop.permute.xlu0 %808
        %v811 = vsel %vm521, %v586, %v801
        %vm812 = vcmask 130048
        %v813 = vsel %vm812, %v811, %v805
        %vm814 = vcmask 195584
        %v815 = vsel %vm814, %v813, %v809
        %v816 = vpack.c.bf16 %v815, %v815
        %v817 = vld [vmem:[%s5] sm:$0xf]
        %v818 = vld [vmem:[%s5 + $0x4] sm:$0xf]
        %v819 = vld [vmem:[%s5 + $0x8] sm:$0xf]
        %v820 = vld [vmem:[%s5 + $0xc] sm:$0xf]
        %v821 = vld [vmem:[%s6] sm:$0x1]
        %v823 = vperm.slane %v821, 0
        %v829 = vunpack.c.l.b16 %v817
        %v830 = vunpack.c.l.b16 %v818
        %v831 = vunpack.c.l.b16 %v819
        %v832 = vunpack.c.l.b16 %v820
        %v833 = vpack.c.b16 %v830, %v829
        %v834 = vpack.c.b16 %v832, %v831
        %v838 = vsel %vm440, %v816, 0
        %840 = vmatpush.bf16.msra.mxu0 0
        %841 = vmatpush.bf16.msra.mxu0 0
        %842 = vmatpush.bf16.msra.mxu0 0
        %843 = vmatpush.bf16.msra.mxu0 0
        %844 = vmatpush.bf16.msra.mxu0 0
        %845 = vmatpush.bf16.msra.mxu0 0
        %846 = vmatpush.bf16.msra.mxu0 %v834
        %847 = vmatpush.bf16.msra.mxu0 %v833
        %848 = vmatmul.bf16.gmra.mxu0 %v838
        %v849 = vpop.f32.mrf.mxu0
        %v850 = vadd.f32 %v823, %v849
        %v851 = vpop.f32.mrf.mxu0
        %852 = vdwg.mxu0
        %v853 = vadd.f32 %v850, %v437
        %v854 = vld [vmem:[%s7] sm:$0x1]
        %v855 = vld [vmem:[%s8] sm:$0x1]
        %v856 = vsel %vm440, %v853, 0.0
        %857 = vadd.xlane.f32.xlu0 %v856
        %v858 = vpop.xlane.xlu0 %857
        %v859 = vmul.f32 %v858, %v450
        %v860 = vsub.f32 %v853, %v859
        %v861 = vmul.f32 %v860, %v860
        %v862 = vsel %vm440, %v861, 0.0
        %863 = vadd.xlane.f32.xlu0 %v862
        %v864 = vpop.xlane.xlu0 %863
        %v865 = vmul.f32 %v864, %v450
        %v866 = vadd.f32 %v865, 1e-06
        %v867 = vrsqrt.pop %v866
        %v868 = vmul.f32 %v867, %v866
        %v869 = vmul.f32 %v868, %v867
        %v870 = vmul.f32 0.5, %v869
        %v871 = vsub.f32 1.5, %v870
        %v872 = vmul.f32 %v867, %v871
        %vm873 = vweird.f32 %v866
        %vm874 = vweird.f32 %v867
        %vm875 = vmor %vm873, %vm874
        %v876 = vsel %vm875, %v867, %v872
        %v877 = vmul.f32 %v860, %v876
        %v879 = vperm.slane %v854, 0
        %v881 = vmul.f32 %v877, %v879
        %v883 = vperm.slane %v855, 0
        %v885 = vadd.f32 %v881, %v883
        %v886 = vpack.c.bf16 %v885, %v885
        %v887 = vld [vmem:[%s9] sm:$0xf]
        %v888 = vld [vmem:[%s9 + $0x4] sm:$0xf]
        %v889 = vld [vmem:[%s9 + $0x8] sm:$0xf]
        %v890 = vld [vmem:[%s9 + $0xc] sm:$0xf]
        %v891 = vld [vmem:[%s10] sm:$0x1]
        %v893 = vperm.slane %v891, 0
        %v899 = vunpack.c.l.b16 %v887
        %v900 = vunpack.c.l.b16 %v888
        %v901 = vunpack.c.l.b16 %v889
        %v902 = vunpack.c.l.b16 %v890
        %v903 = vpack.c.b16 %v900, %v899
        %v904 = vpack.c.b16 %v902, %v901
        %v908 = vsel %vm440, %v886, 0
        %910 = vmatpush.bf16.msra.mxu0 0
        %911 = vmatpush.bf16.msra.mxu0 0
        %912 = vmatpush.bf16.msra.mxu0 0
        %913 = vmatpush.bf16.msra.mxu0 0
        %914 = vmatpush.bf16.msra.mxu0 0
        %915 = vmatpush.bf16.msra.mxu0 0
        %916 = vmatpush.bf16.msra.mxu0 %v904
        %917 = vmatpush.bf16.msra.mxu0 %v903
        %918 = vmatmul.bf16.gmra.mxu0 %v908
        %v919 = vpop.f32.mrf.mxu0
        %v920 = vadd.f32 %v893, %v919
        %v921 = vpop.f32.mrf.mxu0
        %922 = vdwg.mxu0
        %v923 = vmul.f32 %v920, 0.5
        %v924 = vmul.f32 %v920, 0.044715
        %v925 = vmul.f32 %v924, %v920
        %v926 = vmul.f32 %v925, %v920
        %v927 = vadd.f32 %v920, %v926
        %v928 = vmul.f32 %v927, 0.7978846
        %v929 = vtanh.pop %v928
        %v930 = vadd.f32 %v929, 1.0
        %v931 = vmul.f32 %v923, %v930
        %v932 = vpack.c.bf16 %v931, %v931
        %v933 = vld [vmem:[%s11] sm:$0xf]
        %v934 = vld [vmem:[%s11 + $0x4] sm:$0xf]
        %v935 = vld [vmem:[%s11 + $0x8] sm:$0xf]
        %v936 = vld [vmem:[%s11 + $0xc] sm:$0xf]
        %v937 = vld [vmem:[%s11 + $0x10] sm:$0xf]
        %v938 = vld [vmem:[%s11 + $0x14] sm:$0xf]
        %v939 = vld [vmem:[%s11 + $0x18] sm:$0xf]
        %v940 = vld [vmem:[%s11 + $0x1c] sm:$0xf]
        %v941 = vld [vmem:[%s11 + $0x20] sm:$0xf]
        %v942 = vld [vmem:[%s11 + $0x24] sm:$0xf]
        %v943 = vld [vmem:[%s11 + $0x28] sm:$0xf]
        %v944 = vld [vmem:[%s11 + $0x2c] sm:$0xf]
        %v945 = vld [vmem:[%s11 + $0x30] sm:$0xf]
        %v946 = vld [vmem:[%s11 + $0x34] sm:$0xf]
        %v947 = vld [vmem:[%s11 + $0x38] sm:$0xf]
        %v948 = vld [vmem:[%s11 + $0x3c] sm:$0xf]
        %v949 = vld [vmem:[%s12] sm:$0x1]
        %v951 = vperm.slane %v949, 0
        %v969 = vunpack.c.l.b16 %v933
        %v970 = vunpack.c.l.b16 %v934
        %v971 = vunpack.c.l.b16 %v935
        %v972 = vunpack.c.l.b16 %v936
        %v973 = vunpack.c.l.b16 %v937
        %v974 = vunpack.c.l.b16 %v938
        %v975 = vunpack.c.l.b16 %v939
        %v976 = vunpack.c.l.b16 %v940
        %v977 = vunpack.c.l.b16 %v941
        %v978 = vunpack.c.l.b16 %v942
        %v979 = vunpack.c.l.b16 %v943
        %v980 = vunpack.c.l.b16 %v944
        %v981 = vunpack.c.l.b16 %v945
        %v982 = vunpack.c.l.b16 %v946
        %v983 = vunpack.c.l.b16 %v947
        %v984 = vunpack.c.l.b16 %v948
        %v985 = vpack.c.b16 %v970, %v969
        %v986 = vpack.c.b16 %v972, %v971
        %v987 = vpack.c.b16 %v974, %v973
        %v988 = vpack.c.b16 %v976, %v975
        %v989 = vpack.c.b16 %v978, %v977
        %v990 = vpack.c.b16 %v980, %v979
        %v991 = vpack.c.b16 %v982, %v981
        %v992 = vpack.c.b16 %v984, %v983
        %1001 = vmatpush.bf16.msra.mxu0 %v992
        %1002 = vmatpush.bf16.msra.mxu0 %v991
        %1003 = vmatpush.bf16.msra.mxu0 %v990
        %1004 = vmatpush.bf16.msra.mxu0 %v989
        %1005 = vmatpush.bf16.msra.mxu0 %v988
        %1006 = vmatpush.bf16.msra.mxu0 %v987
        %1007 = vmatpush.bf16.msra.mxu0 %v986
        %1008 = vmatpush.bf16.msra.mxu0 %v985
        %1009 = vmatmul.bf16.gmra.mxu0 %v932
        %v1010 = vpop.f32.mrf.mxu0
        %v1011 = vadd.f32 %v951, %v1010
        %v1012 = vpop.f32.mrf.mxu0
        %1013 = vdwg.mxu0
        %v1014 = vadd.f32 %v1011, %v853
        %1015 = vst.msk [vmem:[%s431] sm:$0xff] %vm440, %v1014
        %s1016 = sand.u32 %s313, 1
        %s1017 = scalar_lea.sflag [#allocation3], %s1016
        %s1018 = sand.u32 %s313, 1
        %s1019 = smul.addr %s1018, 8
        %s1020 = scalar_lea.vmem [#allocation2], %s1019
        // Predicated region
        $region73: #{mae_encoder_pallas.1} parent=71 // pred_check
          %p1021 = pneg %p323
        $region74: #{mae_encoder_pallas.1} parent=71 // pred_check_branch
          %1023 = sbr.rel (%p1021) target = $region76
        $region75: #{mae_encoder_pallas.1} parent=71 // pred_region
          %1025 = vsyncadd %s1017, 0
          %s1026 = smul.addr %s27, 8
          %s1027 = scalar_lea.hbm %s13, %s1026
          %s1029 = sshll.u32 %s1020, 4
          %s1030 = int_to_ptr.vmem [resolvable:$true] %s1029
          %s1031 = sshll.u32 %s1027, 4
          %s1032 = int_to_ptr.hbm [resolvable:$true] %s1031
          %1034 = dma.vmem_to_hbm [thread:$0]  %s1030, 128, %s1032, %s1017
        $region76: #{mae_encoder_pallas.1} parent=71 // pred_fallthru
          _
      $region72: #{mae_encoder_pallas.1} parent=5 // pred_fallthru
        _
      %p1035 = scmp.le.s32.totalorder 2, %s22
      // Predicated region
      $region77: #{mae_encoder_pallas.1} parent=5 // pred_check
        %p1036 = pneg %p1035
      $region78: #{mae_encoder_pallas.1} parent=5 // pred_check_branch
        %1038 = sbr.rel (%p1036) target = $region80
      $region79: #{mae_encoder_pallas.1} parent=5 // pred_region
        %s1039 = ssub.s32 %s22, 2
        // Predicated region
        $region81: #{mae_encoder_pallas.1} parent=79 // pred_check
          %p1040 = pneg %p329
        $region82: #{mae_encoder_pallas.1} parent=79 // pred_check_branch
          %1042 = sbr.rel (%p1040) target = $region84
        $region83: #{mae_encoder_pallas.1} parent=79 // pred_region
          %s1043 = sand.u32 %s314, 1
          %s1044 = scalar_lea.sflag [#allocation3], %s1043
          %s1045 = sand.u32 %s314, 1
          %s1046 = smul.addr %s1045, 8
          %s1047 = scalar_lea.vmem [#allocation2], %s1046
          %1049 = dma.done %s1044, 128
        $region84: #{mae_encoder_pallas.1} parent=79 // pred_fallthru
          _
      $region80: #{mae_encoder_pallas.1} parent=5 // pred_fallthru
        _
    $region6: #{mae_encoder_pallas.1} parent=1 // loop_footer
      %s26 = sadd.s32 1, %s22
    $region7: #{mae_encoder_pallas.1} parent=1 // loop_footer_branch
      %21 = sbr.rel target = $region3
    $region8: #{mae_encoder_pallas.1} parent=1 // loop_exit
      _
    %1050 = vsyncpa [#allocation3], 1
    %s1051 = scalar_lea.sflag [#allocation3], 1
    %1052 = vsyncpa %s1051, 1

</llo_original>
